<compile_context>
chip_gen: v7x
topology: tpu7x:2x2x1
jax: 0.10.0
libtpu: 0.0.40
codegen_flags: <defaults>
</compile_context>

<pallas_src>
import jax
import jax.numpy as jnp
from jax import lax
from jax.experimental import pallas as pl
from jax.experimental.pallas import tpu as pltpu

# The kernel contains no matmuls (pure f32 VPU math); this flag only keeps the
# one-time fc1∘fc2 fold in prepare_params and the pure-JAX reference in true
# f32 so the correctness check can stay tight.
jax.config.update("jax_default_matmul_precision", "highest")


# ---------------- fused forward kernel ----------------

def _convnet_kernel(taps_ref, w1v_ref, b1v_ref, w2v_ref, b2_ref,
                    wf_ref, bf_ref, out_ref):
    """Whole ConvNet forward in a single invocation (values only, no scratch).

    taps_ref : (9, 5N, 140) VMEM  conv1 taps, t = dh*3+dw;
               row  = hp*N + n            (hp = pool1 out row, n = batch)
               lane = a*70 + b*35 + co*7 + (wp+1)
               (a,b = 2x2 pool offset, co = conv1 out channel, wp = pool1 out
                col; lanes with wp+1 in {0,6} are zero - conv2's width pad)
    w1v_ref  : (9, 1, 140) VMEM  conv1 weights broadcast to the tap lane
               layout (zero at the padding lanes)
    b1v_ref  : (1, 140) VMEM   conv1 bias on the same lanes (zero at padding)
    w2v_ref  : (18, 1, 33) VMEM  conv2 weights, index t*2+co;
               lane j = ci*7 + wp holds conv2_w[co,ci,dh,dw] (0 if j%7 > 4)
    b2_ref   : (2,) SMEM   conv2 bias (only 2 scalar reads total)
    wf_ref   : (32, 1, 10) VMEM  folded fc weight  (fc1_w.T @ fc2_w.T)
    bf_ref   : (1, 10) VMEM     folded fc bias     (fc1_b @ fc2_w.T + fc2_b)
    out_ref  : (N, 10) VMEM
    """
    n = out_ref.shape[0]
    f32 = jnp.float32

    # ---- layer1: Conv2d(1->5, k=3, s=3, p=1) + ReLU + MaxPool2d(2, 2) ----
    # 9 full-width FMAs; each tap is loaded, used once and dropped.
    acc1 = w1v_ref[0] * taps_ref[0]                         # (5N, 140)
    for t in range(1, 9):
        acc1 = acc1 + w1v_ref[t] * taps_ref[t]
    y1 = jnp.maximum(acc1 + b1v_ref[...], 0.0)              # bias + ReLU
    # 2x2 pool == max over the four (a,b) lane segments of 35.
    p1 = jnp.maximum(jnp.maximum(y1[:, 0:35], y1[:, 35:70]),
                     jnp.maximum(y1[:, 70:105], y1[:, 105:140]))   # (5N, 35)
    # p1: row = hp*N + n, lane = ci*7 + (w+1); lanes ci*7 + {0,6} are zero.

    # ---- layer2: Conv2d(5->2, k=3, s=1, p=1) + ReLU + MaxPool2d(2, 1) ----
    zrow = jnp.zeros((n, 35), f32)
    x2 = jnp.concatenate([zrow, p1, zrow], axis=0)          # (7N, 35), h-padded
    acc2 = [None, None]
    for dh in range(3):
        slab = x2[dh * n:(dh + 5) * n, :]                   # (5N, 35)
        for dw in range(3):
            sh = slab[:, dw:dw + 33]                        # (5N, 33)
            t = dh * 3 + dw
            for co in range(2):
                term = w2v_ref[t * 2 + co] * sh             # (1,33) * (5N,33)
                acc2[co] = term if acc2[co] is None else acc2[co] + term

    f2 = []
    for co in range(2):
        s = acc2[co]
        # reduce over the 5 input-channel lane blocks -> (5N, 5)
        y = (s[:, 0:5] + s[:, 7:12] + s[:, 14:19] + s[:, 21:26] + s[:, 28:33])
        y = jnp.maximum(y + b2_ref[co], 0.0)                # bias + ReLU
        mw = jnp.maximum(y[:, 0:4], y[:, 1:5])              # pool along w
        f2.append(jnp.maximum(mw[0:4 * n, :], mw[n:5 * n, :]))  # pool along h -> (4N, 4)

    # ---- flatten (PyTorch NCHW order) + folded fc1∘fc2 as 32 exact VPU MACs ----
    # TODO(synk): nn.Dropout is declared in __init__ but never applied in
    # forward(); this is the inference path, so it is omitted.
    out = jnp.zeros((n, 10), f32) + bf_ref[...]
    for c in range(2):
        for i in range(4):
            blk = f2[c][i * n:(i + 1) * n, :]               # (N, 4)
            for j in range(4):
                out = out + blk[:, j:j + 1] * wf_ref[c * 16 + i * 4 + j]
    out_ref[...] = out


# ---------------- wrapper glue ----------------

def _prep_conv1_taps(x):
    """(N,1,28,28) -> (9, 5N, 140) lane-dense conv1∘pool1 taps.

    conv1 has stride == kernel == 3 with padding 1, so the padded 30x30 image
    partitions exactly into the 10x10 conv1 receptive fields; fusing the 2x2
    pool, tap t=(dh,dw) of pool output (hp,wp) at pool offset (a,b) reads
    xpad[6hp+3a+dh, 6wp+3b+dw].  Pure pad + reshape + transpose, plus a
    broadcast over the 5 output channels and a 1-lane zero border per channel
    block (conv2's width padding is thereby already in the layout).
    """
    n = x.shape[0]
    xp = jnp.pad(x[:, 0], ((0, 0), (1, 1), (1, 1)))              # (N, 30, 30)
    t = xp.reshape(n, 5, 2, 3, 5, 2, 3)                          # (n,hp,a,dh,wp,b,dw)
    t = jnp.transpose(t, (3, 6, 1, 0, 2, 5, 4))                  # (dh,dw,hp,n,a,b,wp)
    t = jnp.broadcast_to(t[:, :, :, :, :, :, None, :],
                         (3, 3, 5, n, 2, 2, 5, 5))               # insert co axis
    t = jnp.pad(t, [(0, 0)] * 7 + [(1, 1)])                      # wp 5 -> 7 (zero border)
    return t.reshape(9, 5 * n, 140)


def convnet_forward(x, kp):
    n = x.shape[0]
    taps = _prep_conv1_taps(x)
    vmem = pl.BlockSpec(memory_space=pltpu.MemorySpace.VMEM)
    smem = pl.BlockSpec(memory_space=pltpu.MemorySpace.SMEM)
    return pl.pallas_call(
        _convnet_kernel,
        out_shape=jax.ShapeDtypeStruct((n, 10), jnp.float32),
        in_specs=[vmem, vmem, vmem, vmem, smem, vmem, vmem],
        out_specs=vmem,
    )(taps, kp["w1v"], kp["b1v"], kp["w2v"], kp["b2"], kp["wf"], kp["bf"])


# ---------------- parameters ----------------

def init_params(key):
    ks = jax.random.split(key, 8)

    def u(k, shape, fan_in):
        bound = 1.0 / jnp.sqrt(jnp.float32(fan_in))
        return jax.random.uniform(k, shape, jnp.float32, -bound, bound)

    return dict(
        conv1_w=u(ks[0], (5, 1, 3, 3), 9),  conv1_b=u(ks[1], (5,), 9),
        conv2_w=u(ks[2], (2, 5, 3, 3), 45), conv2_b=u(ks[3], (2,), 45),
        fc1_w=u(ks[4], (10, 32), 32),       fc1_b=u(ks[5], (10,), 32),
        fc2_w=u(ks[6], (10, 10), 10),       fc2_b=u(ks[7], (10,), 10),
    )


def prepare_params(p):
    """One-time re-layout / algebraic folding of the PyTorch-style parameters."""
    # conv1 weights & bias broadcast onto the (a, b, co, wpad) lane layout;
    # padding lanes (wpad in {0,6}) carry 0 weight and 0 bias so that after
    # ReLU they are exactly the zeros conv2's width padding needs.
    w1 = jnp.transpose(p["conv1_w"].reshape(5, 9))               # (t, co)
    w1 = jnp.broadcast_to(w1[:, None, None, :, None], (9, 2, 2, 5, 5))
    w1v = jnp.pad(w1, [(0, 0)] * 4 + [(1, 1)]).reshape(9, 1, 140)
    b1 = jnp.broadcast_to(p["conv1_b"][None, None, :, None], (2, 2, 5, 5))
    b1v = jnp.pad(b1, [(0, 0)] * 3 + [(1, 1)]).reshape(1, 140)
    # conv2 weights as lane vectors over the (ci, wp) blocks of 7 lanes.
    w2 = jnp.transpose(p["conv2_w"], (2, 3, 0, 1)).reshape(9, 2, 5, 1)   # (t,co,ci,1)
    w2 = jnp.broadcast_to(w2, (9, 2, 5, 5))
    w2 = jnp.pad(w2, [(0, 0), (0, 0), (0, 0), (0, 2)])           # (9,2,5,7)
    w2v = w2.reshape(9, 2, 35)[:, :, :33].reshape(18, 1, 33)
    # fc1 ∘ fc2 folded (no activation between them in the PyTorch forward).
    wf = (p["fc1_w"].T @ p["fc2_w"].T).reshape(32, 1, 10)
    bf = (p["fc1_b"] @ p["fc2_w"].T + p["fc2_b"]).reshape(1, 10)
    return dict(w1v=w1v, b1v=b1v, w2v=w2v, b2=p["conv2_b"], wf=wf, bf=bf)


# ---------------- pure-JAX reference (for verification) ----------------

def reference_forward(x, p):
    dn = ('NCHW', 'OIHW', 'NCHW')
    y = lax.conv_general_dilated(x, p["conv1_w"], (3, 3), ((1, 1), (1, 1)),
                                 dimension_numbers=dn)
    y = jnp.maximum(y + p["conv1_b"].reshape(1, 5, 1, 1), 0.0)
    y = lax.reduce_window(y, -jnp.inf, lax.max, (1, 1, 2, 2), (1, 1, 2, 2), 'VALID')
    y = lax.conv_general_dilated(y, p["conv2_w"], (1, 1), ((1, 1), (1, 1)),
                                 dimension_numbers=dn)
    y = jnp.maximum(y + p["conv2_b"].reshape(1, 2, 1, 1), 0.0)
    y = lax.reduce_window(y, -jnp.inf, lax.max, (1, 1, 2, 2), (1, 1, 1, 1), 'VALID')
    y = y.reshape(y.shape[0], -1)
    y = y @ p["fc1_w"].T + p["fc1_b"]
    y = y @ p["fc2_w"].T + p["fc2_b"]
    return y


if __name__ == "__main__":
    key = jax.random.PRNGKey(0)
    kx, kparams = jax.random.split(key)
    # fc1 expects 4*4*2 = 32 features -> 28x28 MNIST-style input; small batch 2.
    x = jax.random.normal(kx, (2, 1, 28, 28), jnp.float32)
    params = init_params(kparams)
    kernel_params = prepare_params(params)          # one-time weight re-layout / fc fold

    fwd = jax.jit(convnet_forward)
    out = jax.block_until_ready(fwd(x, kernel_params))
    ref = jax.block_until_ready(jax.jit(reference_forward)(x, params))

    assert out.shape == (2, 10), out.shape
    max_diff = float(jnp.max(jnp.abs(out - ref)))
    assert jnp.allclose(out, ref, atol=5e-5, rtol=5e-5), f"max abs diff {max_diff}"
    print("KERNEL_OK")
</pallas_src>

<mosaic_0001>
module attributes {stable_mosaic.version = 11 : i64} {
  func.func @_convnet_kernel(%arg0: memref<9x10x140xf32, #tpu.memory_space<vmem>>, %arg1: memref<9x1x140xf32, #tpu.memory_space<vmem>>, %arg2: memref<1x140xf32, #tpu.memory_space<vmem>>, %arg3: memref<18x1x33xf32, #tpu.memory_space<vmem>>, %arg4: memref<2xf32, #tpu.memory_space<smem>>, %arg5: memref<32x1x10xf32, #tpu.memory_space<vmem>>, %arg6: memref<1x10xf32, #tpu.memory_space<vmem>>, %arg7: memref<2x10xf32, #tpu.memory_space<vmem>>) attributes {dimension_semantics = [], scalar_prefetch = 0 : i64, scratch_operands = 0 : i64, tpu.core_type = #tpu.core_type<tc>} {
    %c0 = arith.constant 0 : index
    %c0_0 = arith.constant 0 : index
    %c0_1 = arith.constant 0 : index
    %0 = vector.load %arg1[%c0, %c0_0, %c0_1] : memref<9x1x140xf32, #tpu.memory_space<vmem>>, vector<1x1x140xf32>
    %1 = vector.shape_cast %0 : vector<1x1x140xf32> to vector<1x140xf32>
    %c0_2 = arith.constant 0 : index
    %c0_3 = arith.constant 0 : index
    %c0_4 = arith.constant 0 : index
    %2 = vector.load %arg0[%c0_2, %c0_3, %c0_4] : memref<9x10x140xf32, #tpu.memory_space<vmem>>, vector<1x10x140xf32>
    %3 = vector.shape_cast %2 : vector<1x10x140xf32> to vector<10x140xf32>
    %4 = vector.broadcast %1 : vector<1x140xf32> to vector<10x140xf32>
    %5 = arith.mulf %4, %3 : vector<10x140xf32>
    %c1 = arith.constant 1 : index
    %c0_5 = arith.constant 0 : index
    %c0_6 = arith.constant 0 : index
    %6 = vector.load %arg1[%c1, %c0_5, %c0_6] : memref<9x1x140xf32, #tpu.memory_space<vmem>>, vector<1x1x140xf32>
    %7 = vector.shape_cast %6 : vector<1x1x140xf32> to vector<1x140xf32>
    %c1_7 = arith.constant 1 : index
    %c0_8 = arith.constant 0 : index
    %c0_9 = arith.constant 0 : index
    %8 = vector.load %arg0[%c1_7, %c0_8, %c0_9] : memref<9x10x140xf32, #tpu.memory_space<vmem>>, vector<1x10x140xf32>
    %9 = vector.shape_cast %8 : vector<1x10x140xf32> to vector<10x140xf32>
    %10 = vector.broadcast %7 : vector<1x140xf32> to vector<10x140xf32>
    %11 = arith.mulf %10, %9 : vector<10x140xf32>
    %12 = arith.addf %5, %11 : vector<10x140xf32>
    %c2 = arith.constant 2 : index
    %c0_10 = arith.constant 0 : index
    %c0_11 = arith.constant 0 : index
    %13 = vector.load %arg1[%c2, %c0_10, %c0_11] : memref<9x1x140xf32, #tpu.memory_space<vmem>>, vector<1x1x140xf32>
    %14 = vector.shape_cast %13 : vector<1x1x140xf32> to vector<1x140xf32>
    %c2_12 = arith.constant 2 : index
    %c0_13 = arith.constant 0 : index
    %c0_14 = arith.constant 0 : index
    %15 = vector.load %arg0[%c2_12, %c0_13, %c0_14] : memref<9x10x140xf32, #tpu.memory_space<vmem>>, vector<1x10x140xf32>
    %16 = vector.shape_cast %15 : vector<1x10x140xf32> to vector<10x140xf32>
    %17 = vector.broadcast %14 : vector<1x140xf32> to vector<10x140xf32>
    %18 = arith.mulf %17, %16 : vector<10x140xf32>
    %19 = arith.addf %12, %18 : vector<10x140xf32>
    %c3 = arith.constant 3 : index
    %c0_15 = arith.constant 0 : index
    %c0_16 = arith.constant 0 : index
    %20 = vector.load %arg1[%c3, %c0_15, %c0_16] : memref<9x1x140xf32, #tpu.memory_space<vmem>>, vector<1x1x140xf32>
    %21 = vector.shape_cast %20 : vector<1x1x140xf32> to vector<1x140xf32>
    %c3_17 = arith.constant 3 : index
    %c0_18 = arith.constant 0 : index
    %c0_19 = arith.constant 0 : index
    %22 = vector.load %arg0[%c3_17, %c0_18, %c0_19] : memref<9x10x140xf32, #tpu.memory_space<vmem>>, vector<1x10x140xf32>
    %23 = vector.shape_cast %22 : vector<1x10x140xf32> to vector<10x140xf32>
    %24 = vector.broadcast %21 : vector<1x140xf32> to vector<10x140xf32>
    %25 = arith.mulf %24, %23 : vector<10x140xf32>
    %26 = arith.addf %19, %25 : vector<10x140xf32>
    %c4 = arith.constant 4 : index
    %c0_20 = arith.constant 0 : index
    %c0_21 = arith.constant 0 : index
    %27 = vector.load %arg1[%c4, %c0_20, %c0_21] : memref<9x1x140xf32, #tpu.memory_space<vmem>>, vector<1x1x140xf32>
    %28 = vector.shape_cast %27 : vector<1x1x140xf32> to vector<1x140xf32>
    %c4_22 = arith.constant 4 : index
    %c0_23 = arith.constant 0 : index
    %c0_24 = arith.constant 0 : index
    %29 = vector.load %arg0[%c4_22, %c0_23, %c0_24] : memref<9x10x140xf32, #tpu.memory_space<vmem>>, vector<1x10x140xf32>
    %30 = vector.shape_cast %29 : vector<1x10x140xf32> to vector<10x140xf32>
    %31 = vector.broadcast %28 : vector<1x140xf32> to vector<10x140xf32>
    %32 = arith.mulf %31, %30 : vector<10x140xf32>
    %33 = arith.addf %26, %32 : vector<10x140xf32>
    %c5 = arith.constant 5 : index
    %c0_25 = arith.constant 0 : index
    %c0_26 = arith.constant 0 : index
    %34 = vector.load %arg1[%c5, %c0_25, %c0_26] : memref<9x1x140xf32, #tpu.memory_space<vmem>>, vector<1x1x140xf32>
    %35 = vector.shape_cast %34 : vector<1x1x140xf32> to vector<1x140xf32>
    %c5_27 = arith.constant 5 : index
    %c0_28 = arith.constant 0 : index
    %c0_29 = arith.constant 0 : index
    %36 = vector.load %arg0[%c5_27, %c0_28, %c0_29] : memref<9x10x140xf32, #tpu.memory_space<vmem>>, vector<1x10x140xf32>
    %37 = vector.shape_cast %36 : vector<1x10x140xf32> to vector<10x140xf32>
    %38 = vector.broadcast %35 : vector<1x140xf32> to vector<10x140xf32>
    %39 = arith.mulf %38, %37 : vector<10x140xf32>
    %40 = arith.addf %33, %39 : vector<10x140xf32>
    %c6 = arith.constant 6 : index
    %c0_30 = arith.constant 0 : index
    %c0_31 = arith.constant 0 : index
    %41 = vector.load %arg1[%c6, %c0_30, %c0_31] : memref<9x1x140xf32, #tpu.memory_space<vmem>>, vector<1x1x140xf32>
    %42 = vector.shape_cast %41 : vector<1x1x140xf32> to vector<1x140xf32>
    %c6_32 = arith.constant 6 : index
    %c0_33 = arith.constant 0 : index
    %c0_34 = arith.constant 0 : index
    %43 = vector.load %arg0[%c6_32, %c0_33, %c0_34] : memref<9x10x140xf32, #tpu.memory_space<vmem>>, vector<1x10x140xf32>
    %44 = vector.shape_cast %43 : vector<1x10x140xf32> to vector<10x140xf32>
    %45 = vector.broadcast %42 : vector<1x140xf32> to vector<10x140xf32>
    %46 = arith.mulf %45, %44 : vector<10x140xf32>
    %47 = arith.addf %40, %46 : vector<10x140xf32>
    %c7 = arith.constant 7 : index
    %c0_35 = arith.constant 0 : index
    %c0_36 = arith.constant 0 : index
    %48 = vector.load %arg1[%c7, %c0_35, %c0_36] : memref<9x1x140xf32, #tpu.memory_space<vmem>>, vector<1x1x140xf32>
    %49 = vector.shape_cast %48 : vector<1x1x140xf32> to vector<1x140xf32>
    %c7_37 = arith.constant 7 : index
    %c0_38 = arith.constant 0 : index
    %c0_39 = arith.constant 0 : index
    %50 = vector.load %arg0[%c7_37, %c0_38, %c0_39] : memref<9x10x140xf32, #tpu.memory_space<vmem>>, vector<1x10x140xf32>
    %51 = vector.shape_cast %50 : vector<1x10x140xf32> to vector<10x140xf32>
    %52 = vector.broadcast %49 : vector<1x140xf32> to vector<10x140xf32>
    %53 = arith.mulf %52, %51 : vector<10x140xf32>
    %54 = arith.addf %47, %53 : vector<10x140xf32>
    %c8 = arith.constant 8 : index
    %c0_40 = arith.constant 0 : index
    %c0_41 = arith.constant 0 : index
    %55 = vector.load %arg1[%c8, %c0_40, %c0_41] : memref<9x1x140xf32, #tpu.memory_space<vmem>>, vector<1x1x140xf32>
    %56 = vector.shape_cast %55 : vector<1x1x140xf32> to vector<1x140xf32>
    %c8_42 = arith.constant 8 : index
    %c0_43 = arith.constant 0 : index
    %c0_44 = arith.constant 0 : index
    %57 = vector.load %arg0[%c8_42, %c0_43, %c0_44] : memref<9x10x140xf32, #tpu.memory_space<vmem>>, vector<1x10x140xf32>
    %58 = vector.shape_cast %57 : vector<1x10x140xf32> to vector<10x140xf32>
    %59 = vector.broadcast %56 : vector<1x140xf32> to vector<10x140xf32>
    %60 = arith.mulf %59, %58 : vector<10x140xf32>
    %61 = arith.addf %54, %60 : vector<10x140xf32>
    %c0_45 = arith.constant 0 : index
    %c0_46 = arith.constant 0 : index
    %62 = vector.load %arg2[%c0_45, %c0_46] : memref<1x140xf32, #tpu.memory_space<vmem>>, vector<1x140xf32>
    %63 = vector.broadcast %62 : vector<1x140xf32> to vector<10x140xf32>
    %64 = arith.addf %61, %63 : vector<10x140xf32>
    %cst = arith.constant 0.000000e+00 : f32
    %65 = vector.broadcast %cst : f32 to vector<10x140xf32>
    %66 = arith.maximumf %64, %65 : vector<10x140xf32>
    %67 = vector.extract_strided_slice %66 {offsets = [0, 0], sizes = [10, 35], strides = [1, 1]} : vector<10x140xf32> to vector<10x35xf32>
    %68 = vector.extract_strided_slice %66 {offsets = [0, 35], sizes = [10, 35], strides = [1, 1]} : vector<10x140xf32> to vector<10x35xf32>
    %69 = arith.maximumf %67, %68 : vector<10x35xf32>
    %70 = vector.extract_strided_slice %66 {offsets = [0, 70], sizes = [10, 35], strides = [1, 1]} : vector<10x140xf32> to vector<10x35xf32>
    %71 = vector.extract_strided_slice %66 {offsets = [0, 105], sizes = [10, 35], strides = [1, 1]} : vector<10x140xf32> to vector<10x35xf32>
    %72 = arith.maximumf %70, %71 : vector<10x35xf32>
    %73 = arith.maximumf %69, %72 : vector<10x35xf32>
    %cst_47 = arith.constant 0.000000e+00 : f32
    %74 = vector.broadcast %cst_47 : f32 to vector<2x35xf32>
    %75 = tpu.concatenate %74, %73, %74 in 0 : vector<2x35xf32>, vector<10x35xf32>, vector<2x35xf32> -> vector<14x35xf32>
    %76 = vector.extract_strided_slice %75 {offsets = [0, 0], sizes = [10, 35], strides = [1, 1]} : vector<14x35xf32> to vector<10x35xf32>
    %77 = vector.extract_strided_slice %76 {offsets = [0, 0], sizes = [10, 33], strides = [1, 1]} : vector<10x35xf32> to vector<10x33xf32>
    %c0_48 = arith.constant 0 : index
    %c0_49 = arith.constant 0 : index
    %c0_50 = arith.constant 0 : index
    %78 = vector.load %arg3[%c0_48, %c0_49, %c0_50] : memref<18x1x33xf32, #tpu.memory_space<vmem>>, vector<1x1x33xf32>
    %79 = vector.shape_cast %78 : vector<1x1x33xf32> to vector<1x33xf32>
    %80 = vector.broadcast %79 : vector<1x33xf32> to vector<10x33xf32>
    %81 = arith.mulf %80, %77 : vector<10x33xf32>
    %c1_51 = arith.constant 1 : index
    %c0_52 = arith.constant 0 : index
    %c0_53 = arith.constant 0 : index
    %82 = vector.load %arg3[%c1_51, %c0_52, %c0_53] : memref<18x1x33xf32, #tpu.memory_space<vmem>>, vector<1x1x33xf32>
    %83 = vector.shape_cast %82 : vector<1x1x33xf32> to vector<1x33xf32>
    %84 = vector.broadcast %83 : vector<1x33xf32> to vector<10x33xf32>
    %85 = arith.mulf %84, %77 : vector<10x33xf32>
    %86 = vector.extract_strided_slice %76 {offsets = [0, 1], sizes = [10, 33], strides = [1, 1]} : vector<10x35xf32> to vector<10x33xf32>
    %c2_54 = arith.constant 2 : index
    %c0_55 = arith.constant 0 : index
    %c0_56 = arith.constant 0 : index
    %87 = vector.load %arg3[%c2_54, %c0_55, %c0_56] : memref<18x1x33xf32, #tpu.memory_space<vmem>>, vector<1x1x33xf32>
    %88 = vector.shape_cast %87 : vector<1x1x33xf32> to vector<1x33xf32>
    %89 = vector.broadcast %88 : vector<1x33xf32> to vector<10x33xf32>
    %90 = arith.mulf %89, %86 : vector<10x33xf32>
    %91 = arith.addf %81, %90 : vector<10x33xf32>
    %c3_57 = arith.constant 3 : index
    %c0_58 = arith.constant 0 : index
    %c0_59 = arith.constant 0 : index
    %92 = vector.load %arg3[%c3_57, %c0_58, %c0_59] : memref<18x1x33xf32, #tpu.memory_space<vmem>>, vector<1x1x33xf32>
    %93 = vector.shape_cast %92 : vector<1x1x33xf32> to vector<1x33xf32>
    %94 = vector.broadcast %93 : vector<1x33xf32> to vector<10x33xf32>
    %95 = arith.mulf %94, %86 : vector<10x33xf32>
    %96 = arith.addf %85, %95 : vector<10x33xf32>
    %97 = vector.extract_strided_slice %76 {offsets = [0, 2], sizes = [10, 33], strides = [1, 1]} : vector<10x35xf32> to vector<10x33xf32>
    %c4_60 = arith.constant 4 : index
    %c0_61 = arith.constant 0 : index
    %c0_62 = arith.constant 0 : index
    %98 = vector.load %arg3[%c4_60, %c0_61, %c0_62] : memref<18x1x33xf32, #tpu.memory_space<vmem>>, vector<1x1x33xf32>
    %99 = vector.shape_cast %98 : vector<1x1x33xf32> to vector<1x33xf32>
    %100 = vector.broadcast %99 : vector<1x33xf32> to vector<10x33xf32>
    %101 = arith.mulf %100, %97 : vector<10x33xf32>
    %102 = arith.addf %91, %101 : vector<10x33xf32>
    %c5_63 = arith.constant 5 : index
    %c0_64 = arith.constant 0 : index
    %c0_65 = arith.constant 0 : index
    %103 = vector.load %arg3[%c5_63, %c0_64, %c0_65] : memref<18x1x33xf32, #tpu.memory_space<vmem>>, vector<1x1x33xf32>
    %104 = vector.shape_cast %103 : vector<1x1x33xf32> to vector<1x33xf32>
    %105 = vector.broadcast %104 : vector<1x33xf32> to vector<10x33xf32>
    %106 = arith.mulf %105, %97 : vector<10x33xf32>
    %107 = arith.addf %96, %106 : vector<10x33xf32>
    %108 = vector.extract_strided_slice %75 {offsets = [2, 0], sizes = [10, 35], strides = [1, 1]} : vector<14x35xf32> to vector<10x35xf32>
    %109 = vector.extract_strided_slice %108 {offsets = [0, 0], sizes = [10, 33], strides = [1, 1]} : vector<10x35xf32> to vector<10x33xf32>
    %c6_66 = arith.constant 6 : index
    %c0_67 = arith.constant 0 : index
    %c0_68 = arith.constant 0 : index
    %110 = vector.load %arg3[%c6_66, %c0_67, %c0_68] : memref<18x1x33xf32, #tpu.memory_space<vmem>>, vector<1x1x33xf32>
    %111 = vector.shape_cast %110 : vector<1x1x33xf32> to vector<1x33xf32>
    %112 = vector.broadcast %111 : vector<1x33xf32> to vector<10x33xf32>
    %113 = arith.mulf %112, %109 : vector<10x33xf32>
    %114 = arith.addf %102, %113 : vector<10x33xf32>
    %c7_69 = arith.constant 7 : index
    %c0_70 = arith.constant 0 : index
    %c0_71 = arith.constant 0 : index
    %115 = vector.load %arg3[%c7_69, %c0_70, %c0_71] : memref<18x1x33xf32, #tpu.memory_space<vmem>>, vector<1x1x33xf32>
    %116 = vector.shape_cast %115 : vector<1x1x33xf32> to vector<1x33xf32>
    %117 = vector.broadcast %116 : vector<1x33xf32> to vector<10x33xf32>
    %118 = arith.mulf %117, %109 : vector<10x33xf32>
    %119 = arith.addf %107, %118 : vector<10x33xf32>
    %120 = vector.extract_strided_slice %108 {offsets = [0, 1], sizes = [10, 33], strides = [1, 1]} : vector<10x35xf32> to vector<10x33xf32>
    %c8_72 = arith.constant 8 : index
    %c0_73 = arith.constant 0 : index
    %c0_74 = arith.constant 0 : index
    %121 = vector.load %arg3[%c8_72, %c0_73, %c0_74] : memref<18x1x33xf32, #tpu.memory_space<vmem>>, vector<1x1x33xf32>
    %122 = vector.shape_cast %121 : vector<1x1x33xf32> to vector<1x33xf32>
    %123 = vector.broadcast %122 : vector<1x33xf32> to vector<10x33xf32>
    %124 = arith.mulf %123, %120 : vector<10x33xf32>
    %125 = arith.addf %114, %124 : vector<10x33xf32>
    %c9 = arith.constant 9 : index
    %c0_75 = arith.constant 0 : index
    %c0_76 = arith.constant 0 : index
    %126 = vector.load %arg3[%c9, %c0_75, %c0_76] : memref<18x1x33xf32, #tpu.memory_space<vmem>>, vector<1x1x33xf32>
    %127 = vector.shape_cast %126 : vector<1x1x33xf32> to vector<1x33xf32>
    %128 = vector.broadcast %127 : vector<1x33xf32> to vector<10x33xf32>
    %129 = arith.mulf %128, %120 : vector<10x33xf32>
    %130 = arith.addf %119, %129 : vector<10x33xf32>
    %131 = vector.extract_strided_slice %108 {offsets = [0, 2], sizes = [10, 33], strides = [1, 1]} : vector<10x35xf32> to vector<10x33xf32>
    %c10 = arith.constant 10 : index
    %c0_77 = arith.constant 0 : index
    %c0_78 = arith.constant 0 : index
    %132 = vector.load %arg3[%c10, %c0_77, %c0_78] : memref<18x1x33xf32, #tpu.memory_space<vmem>>, vector<1x1x33xf32>
    %133 = vector.shape_cast %132 : vector<1x1x33xf32> to vector<1x33xf32>
    %134 = vector.broadcast %133 : vector<1x33xf32> to vector<10x33xf32>
    %135 = arith.mulf %134, %131 : vector<10x33xf32>
    %136 = arith.addf %125, %135 : vector<10x33xf32>
    %c11 = arith.constant 11 : index
    %c0_79 = arith.constant 0 : index
    %c0_80 = arith.constant 0 : index
    %137 = vector.load %arg3[%c11, %c0_79, %c0_80] : memref<18x1x33xf32, #tpu.memory_space<vmem>>, vector<1x1x33xf32>
    %138 = vector.shape_cast %137 : vector<1x1x33xf32> to vector<1x33xf32>
    %139 = vector.broadcast %138 : vector<1x33xf32> to vector<10x33xf32>
    %140 = arith.mulf %139, %131 : vector<10x33xf32>
    %141 = arith.addf %130, %140 : vector<10x33xf32>
    %142 = vector.extract_strided_slice %75 {offsets = [4, 0], sizes = [10, 35], strides = [1, 1]} : vector<14x35xf32> to vector<10x35xf32>
    %143 = vector.extract_strided_slice %142 {offsets = [0, 0], sizes = [10, 33], strides = [1, 1]} : vector<10x35xf32> to vector<10x33xf32>
    %c12 = arith.constant 12 : index
    %c0_81 = arith.constant 0 : index
    %c0_82 = arith.constant 0 : index
    %144 = vector.load %arg3[%c12, %c0_81, %c0_82] : memref<18x1x33xf32, #tpu.memory_space<vmem>>, vector<1x1x33xf32>
    %145 = vector.shape_cast %144 : vector<1x1x33xf32> to vector<1x33xf32>
    %146 = vector.broadcast %145 : vector<1x33xf32> to vector<10x33xf32>
    %147 = arith.mulf %146, %143 : vector<10x33xf32>
    %148 = arith.addf %136, %147 : vector<10x33xf32>
    %c13 = arith.constant 13 : index
    %c0_83 = arith.constant 0 : index
    %c0_84 = arith.constant 0 : index
    %149 = vector.load %arg3[%c13, %c0_83, %c0_84] : memref<18x1x33xf32, #tpu.memory_space<vmem>>, vector<1x1x33xf32>
    %150 = vector.shape_cast %149 : vector<1x1x33xf32> to vector<1x33xf32>
    %151 = vector.broadcast %150 : vector<1x33xf32> to vector<10x33xf32>
    %152 = arith.mulf %151, %143 : vector<10x33xf32>
    %153 = arith.addf %141, %152 : vector<10x33xf32>
    %154 = vector.extract_strided_slice %142 {offsets = [0, 1], sizes = [10, 33], strides = [1, 1]} : vector<10x35xf32> to vector<10x33xf32>
    %c14 = arith.constant 14 : index
    %c0_85 = arith.constant 0 : index
    %c0_86 = arith.constant 0 : index
    %155 = vector.load %arg3[%c14, %c0_85, %c0_86] : memref<18x1x33xf32, #tpu.memory_space<vmem>>, vector<1x1x33xf32>
    %156 = vector.shape_cast %155 : vector<1x1x33xf32> to vector<1x33xf32>
    %157 = vector.broadcast %156 : vector<1x33xf32> to vector<10x33xf32>
    %158 = arith.mulf %157, %154 : vector<10x33xf32>
    %159 = arith.addf %148, %158 : vector<10x33xf32>
    %c15 = arith.constant 15 : index
    %c0_87 = arith.constant 0 : index
    %c0_88 = arith.constant 0 : index
    %160 = vector.load %arg3[%c15, %c0_87, %c0_88] : memref<18x1x33xf32, #tpu.memory_space<vmem>>, vector<1x1x33xf32>
    %161 = vector.shape_cast %160 : vector<1x1x33xf32> to vector<1x33xf32>
    %162 = vector.broadcast %161 : vector<1x33xf32> to vector<10x33xf32>
    %163 = arith.mulf %162, %154 : vector<10x33xf32>
    %164 = arith.addf %153, %163 : vector<10x33xf32>
    %165 = vector.extract_strided_slice %142 {offsets = [0, 2], sizes = [10, 33], strides = [1, 1]} : vector<10x35xf32> to vector<10x33xf32>
    %c16 = arith.constant 16 : index
    %c0_89 = arith.constant 0 : index
    %c0_90 = arith.constant 0 : index
    %166 = vector.load %arg3[%c16, %c0_89, %c0_90] : memref<18x1x33xf32, #tpu.memory_space<vmem>>, vector<1x1x33xf32>
    %167 = vector.shape_cast %166 : vector<1x1x33xf32> to vector<1x33xf32>
    %168 = vector.broadcast %167 : vector<1x33xf32> to vector<10x33xf32>
    %169 = arith.mulf %168, %165 : vector<10x33xf32>
    %170 = arith.addf %159, %169 : vector<10x33xf32>
    %c17 = arith.constant 17 : index
    %c0_91 = arith.constant 0 : index
    %c0_92 = arith.constant 0 : index
    %171 = vector.load %arg3[%c17, %c0_91, %c0_92] : memref<18x1x33xf32, #tpu.memory_space<vmem>>, vector<1x1x33xf32>
    %172 = vector.shape_cast %171 : vector<1x1x33xf32> to vector<1x33xf32>
    %173 = vector.broadcast %172 : vector<1x33xf32> to vector<10x33xf32>
    %174 = arith.mulf %173, %165 : vector<10x33xf32>
    %175 = arith.addf %164, %174 : vector<10x33xf32>
    %176 = vector.extract_strided_slice %170 {offsets = [0, 0], sizes = [10, 5], strides = [1, 1]} : vector<10x33xf32> to vector<10x5xf32>
    %177 = vector.extract_strided_slice %170 {offsets = [0, 7], sizes = [10, 5], strides = [1, 1]} : vector<10x33xf32> to vector<10x5xf32>
    %178 = arith.addf %176, %177 : vector<10x5xf32>
    %179 = vector.extract_strided_slice %170 {offsets = [0, 14], sizes = [10, 5], strides = [1, 1]} : vector<10x33xf32> to vector<10x5xf32>
    %180 = arith.addf %178, %179 : vector<10x5xf32>
    %181 = vector.extract_strided_slice %170 {offsets = [0, 21], sizes = [10, 5], strides = [1, 1]} : vector<10x33xf32> to vector<10x5xf32>
    %182 = arith.addf %180, %181 : vector<10x5xf32>
    %183 = vector.extract_strided_slice %170 {offsets = [0, 28], sizes = [10, 5], strides = [1, 1]} : vector<10x33xf32> to vector<10x5xf32>
    %184 = arith.addf %182, %183 : vector<10x5xf32>
    %c0_93 = arith.constant 0 : index
    %185 = memref.load %arg4[%c0_93] : memref<2xf32, #tpu.memory_space<smem>>
    %186 = vector.broadcast %185 : f32 to vector<10x5xf32>
    %187 = arith.addf %184, %186 : vector<10x5xf32>
    %cst_94 = arith.constant 0.000000e+00 : f32
    %188 = vector.broadcast %cst_94 : f32 to vector<10x5xf32>
    %189 = arith.maximumf %187, %188 : vector<10x5xf32>
    %190 = vector.extract_strided_slice %189 {offsets = [0, 0], sizes = [10, 4], strides = [1, 1]} : vector<10x5xf32> to vector<10x4xf32>
    %191 = vector.extract_strided_slice %189 {offsets = [0, 1], sizes = [10, 4], strides = [1, 1]} : vector<10x5xf32> to vector<10x4xf32>
    %192 = arith.maximumf %190, %191 : vector<10x4xf32>
    %193 = vector.extract_strided_slice %192 {offsets = [0, 0], sizes = [8, 4], strides = [1, 1]} : vector<10x4xf32> to vector<8x4xf32>
    %194 = vector.extract_strided_slice %192 {offsets = [2, 0], sizes = [8, 4], strides = [1, 1]} : vector<10x4xf32> to vector<8x4xf32>
    %195 = arith.maximumf %193, %194 : vector<8x4xf32>
    %196 = vector.extract_strided_slice %175 {offsets = [0, 0], sizes = [10, 5], strides = [1, 1]} : vector<10x33xf32> to vector<10x5xf32>
    %197 = vector.extract_strided_slice %175 {offsets = [0, 7], sizes = [10, 5], strides = [1, 1]} : vector<10x33xf32> to vector<10x5xf32>
    %198 = arith.addf %196, %197 : vector<10x5xf32>
    %199 = vector.extract_strided_slice %175 {offsets = [0, 14], sizes = [10, 5], strides = [1, 1]} : vector<10x33xf32> to vector<10x5xf32>
    %200 = arith.addf %198, %199 : vector<10x5xf32>
    %201 = vector.extract_strided_slice %175 {offsets = [0, 21], sizes = [10, 5], strides = [1, 1]} : vector<10x33xf32> to vector<10x5xf32>
    %202 = arith.addf %200, %201 : vector<10x5xf32>
    %203 = vector.extract_strided_slice %175 {offsets = [0, 28], sizes = [10, 5], strides = [1, 1]} : vector<10x33xf32> to vector<10x5xf32>
    %204 = arith.addf %202, %203 : vector<10x5xf32>
    %c1_95 = arith.constant 1 : index
    %205 = memref.load %arg4[%c1_95] : memref<2xf32, #tpu.memory_space<smem>>
    %206 = vector.broadcast %205 : f32 to vector<10x5xf32>
    %207 = arith.addf %204, %206 : vector<10x5xf32>
    %cst_96 = arith.constant 0.000000e+00 : f32
    %208 = vector.broadcast %cst_96 : f32 to vector<10x5xf32>
    %209 = arith.maximumf %207, %208 : vector<10x5xf32>
    %210 = vector.extract_strided_slice %209 {offsets = [0, 0], sizes = [10, 4], strides = [1, 1]} : vector<10x5xf32> to vector<10x4xf32>
    %211 = vector.extract_strided_slice %209 {offsets = [0, 1], sizes = [10, 4], strides = [1, 1]} : vector<10x5xf32> to vector<10x4xf32>
    %212 = arith.maximumf %210, %211 : vector<10x4xf32>
    %213 = vector.extract_strided_slice %212 {offsets = [0, 0], sizes = [8, 4], strides = [1, 1]} : vector<10x4xf32> to vector<8x4xf32>
    %214 = vector.extract_strided_slice %212 {offsets = [2, 0], sizes = [8, 4], strides = [1, 1]} : vector<10x4xf32> to vector<8x4xf32>
    %215 = arith.maximumf %213, %214 : vector<8x4xf32>
    %cst_97 = arith.constant 0.000000e+00 : f32
    %216 = vector.broadcast %cst_97 : f32 to vector<2x10xf32>
    %c0_98 = arith.constant 0 : index
    %c0_99 = arith.constant 0 : index
    %217 = vector.load %arg6[%c0_98, %c0_99] : memref<1x10xf32, #tpu.memory_space<vmem>>, vector<1x10xf32>
    %218 = vector.broadcast %217 : vector<1x10xf32> to vector<2x10xf32>
    %219 = arith.addf %216, %218 : vector<2x10xf32>
    %220 = vector.extract_strided_slice %195 {offsets = [0, 0], sizes = [2, 4], strides = [1, 1]} : vector<8x4xf32> to vector<2x4xf32>
    %221 = vector.extract_strided_slice %220 {offsets = [0, 0], sizes = [2, 1], strides = [1, 1]} : vector<2x4xf32> to vector<2x1xf32>
    %c0_100 = arith.constant 0 : index
    %c0_101 = arith.constant 0 : index
    %c0_102 = arith.constant 0 : index
    %222 = vector.load %arg5[%c0_100, %c0_101, %c0_102] : memref<32x1x10xf32, #tpu.memory_space<vmem>>, vector<1x1x10xf32>
    %223 = vector.shape_cast %222 : vector<1x1x10xf32> to vector<1x10xf32>
    %224 = vector.broadcast %221 : vector<2x1xf32> to vector<2x10xf32>
    %225 = vector.broadcast %223 : vector<1x10xf32> to vector<2x10xf32>
    %226 = arith.mulf %224, %225 : vector<2x10xf32>
    %227 = arith.addf %219, %226 : vector<2x10xf32>
    %228 = vector.extract_strided_slice %220 {offsets = [0, 1], sizes = [2, 1], strides = [1, 1]} : vector<2x4xf32> to vector<2x1xf32>
    %c1_103 = arith.constant 1 : index
    %c0_104 = arith.constant 0 : index
    %c0_105 = arith.constant 0 : index
    %229 = vector.load %arg5[%c1_103, %c0_104, %c0_105] : memref<32x1x10xf32, #tpu.memory_space<vmem>>, vector<1x1x10xf32>
    %230 = vector.shape_cast %229 : vector<1x1x10xf32> to vector<1x10xf32>
    %231 = vector.broadcast %228 : vector<2x1xf32> to vector<2x10xf32>
    %232 = vector.broadcast %230 : vector<1x10xf32> to vector<2x10xf32>
    %233 = arith.mulf %231, %232 : vector<2x10xf32>
    %234 = arith.addf %227, %233 : vector<2x10xf32>
    %235 = vector.extract_strided_slice %220 {offsets = [0, 2], sizes = [2, 1], strides = [1, 1]} : vector<2x4xf32> to vector<2x1xf32>
    %c2_106 = arith.constant 2 : index
    %c0_107 = arith.constant 0 : index
    %c0_108 = arith.constant 0 : index
    %236 = vector.load %arg5[%c2_106, %c0_107, %c0_108] : memref<32x1x10xf32, #tpu.memory_space<vmem>>, vector<1x1x10xf32>
    %237 = vector.shape_cast %236 : vector<1x1x10xf32> to vector<1x10xf32>
    %238 = vector.broadcast %235 : vector<2x1xf32> to vector<2x10xf32>
    %239 = vector.broadcast %237 : vector<1x10xf32> to vector<2x10xf32>
    %240 = arith.mulf %238, %239 : vector<2x10xf32>
    %241 = arith.addf %234, %240 : vector<2x10xf32>
    %242 = vector.extract_strided_slice %220 {offsets = [0, 3], sizes = [2, 1], strides = [1, 1]} : vector<2x4xf32> to vector<2x1xf32>
    %c3_109 = arith.constant 3 : index
    %c0_110 = arith.constant 0 : index
    %c0_111 = arith.constant 0 : index
    %243 = vector.load %arg5[%c3_109, %c0_110, %c0_111] : memref<32x1x10xf32, #tpu.memory_space<vmem>>, vector<1x1x10xf32>
    %244 = vector.shape_cast %243 : vector<1x1x10xf32> to vector<1x10xf32>
    %245 = vector.broadcast %242 : vector<2x1xf32> to vector<2x10xf32>
    %246 = vector.broadcast %244 : vector<1x10xf32> to vector<2x10xf32>
    %247 = arith.mulf %245, %246 : vector<2x10xf32>
    %248 = arith.addf %241, %247 : vector<2x10xf32>
    %249 = vector.extract_strided_slice %195 {offsets = [2, 0], sizes = [2, 4], strides = [1, 1]} : vector<8x4xf32> to vector<2x4xf32>
    %250 = vector.extract_strided_slice %249 {offsets = [0, 0], sizes = [2, 1], strides = [1, 1]} : vector<2x4xf32> to vector<2x1xf32>
    %c4_112 = arith.constant 4 : index
    %c0_113 = arith.constant 0 : index
    %c0_114 = arith.constant 0 : index
    %251 = vector.load %arg5[%c4_112, %c0_113, %c0_114] : memref<32x1x10xf32, #tpu.memory_space<vmem>>, vector<1x1x10xf32>
    %252 = vector.shape_cast %251 : vector<1x1x10xf32> to vector<1x10xf32>
    %253 = vector.broadcast %250 : vector<2x1xf32> to vector<2x10xf32>
    %254 = vector.broadcast %252 : vector<1x10xf32> to vector<2x10xf32>
    %255 = arith.mulf %253, %254 : vector<2x10xf32>
    %256 = arith.addf %248, %255 : vector<2x10xf32>
    %257 = vector.extract_strided_slice %249 {offsets = [0, 1], sizes = [2, 1], strides = [1, 1]} : vector<2x4xf32> to vector<2x1xf32>
    %c5_115 = arith.constant 5 : index
    %c0_116 = arith.constant 0 : index
    %c0_117 = arith.constant 0 : index
    %258 = vector.load %arg5[%c5_115, %c0_116, %c0_117] : memref<32x1x10xf32, #tpu.memory_space<vmem>>, vector<1x1x10xf32>
    %259 = vector.shape_cast %258 : vector<1x1x10xf32> to vector<1x10xf32>
    %260 = vector.broadcast %257 : vector<2x1xf32> to vector<2x10xf32>
    %261 = vector.broadcast %259 : vector<1x10xf32> to vector<2x10xf32>
    %262 = arith.mulf %260, %261 : vector<2x10xf32>
    %263 = arith.addf %256, %262 : vector<2x10xf32>
    %264 = vector.extract_strided_slice %249 {offsets = [0, 2], sizes = [2, 1], strides = [1, 1]} : vector<2x4xf32> to vector<2x1xf32>
    %c6_118 = arith.constant 6 : index
    %c0_119 = arith.constant 0 : index
    %c0_120 = arith.constant 0 : index
    %265 = vector.load %arg5[%c6_118, %c0_119, %c0_120] : memref<32x1x10xf32, #tpu.memory_space<vmem>>, vector<1x1x10xf32>
    %266 = vector.shape_cast %265 : vector<1x1x10xf32> to vector<1x10xf32>
    %267 = vector.broadcast %264 : vector<2x1xf32> to vector<2x10xf32>
    %268 = vector.broadcast %266 : vector<1x10xf32> to vector<2x10xf32>
    %269 = arith.mulf %267, %268 : vector<2x10xf32>
    %270 = arith.addf %263, %269 : vector<2x10xf32>
    %271 = vector.extract_strided_slice %249 {offsets = [0, 3], sizes = [2, 1], strides = [1, 1]} : vector<2x4xf32> to vector<2x1xf32>
    %c7_121 = arith.constant 7 : index
    %c0_122 = arith.constant 0 : index
    %c0_123 = arith.constant 0 : index
    %272 = vector.load %arg5[%c7_121, %c0_122, %c0_123] : memref<32x1x10xf32, #tpu.memory_space<vmem>>, vector<1x1x10xf32>
    %273 = vector.shape_cast %272 : vector<1x1x10xf32> to vector<1x10xf32>
    %274 = vector.broadcast %271 : vector<2x1xf32> to vector<2x10xf32>
    %275 = vector.broadcast %273 : vector<1x10xf32> to vector<2x10xf32>
    %276 = arith.mulf %274, %275 : vector<2x10xf32>
    %277 = arith.addf %270, %276 : vector<2x10xf32>
    %278 = vector.extract_strided_slice %195 {offsets = [4, 0], sizes = [2, 4], strides = [1, 1]} : vector<8x4xf32> to vector<2x4xf32>
    %279 = vector.extract_strided_slice %278 {offsets = [0, 0], sizes = [2, 1], strides = [1, 1]} : vector<2x4xf32> to vector<2x1xf32>
    %c8_124 = arith.constant 8 : index
    %c0_125 = arith.constant 0 : index
    %c0_126 = arith.constant 0 : index
    %280 = vector.load %arg5[%c8_124, %c0_125, %c0_126] : memref<32x1x10xf32, #tpu.memory_space<vmem>>, vector<1x1x10xf32>
    %281 = vector.shape_cast %280 : vector<1x1x10xf32> to vector<1x10xf32>
    %282 = vector.broadcast %279 : vector<2x1xf32> to vector<2x10xf32>
    %283 = vector.broadcast %281 : vector<1x10xf32> to vector<2x10xf32>
    %284 = arith.mulf %282, %283 : vector<2x10xf32>
    %285 = arith.addf %277, %284 : vector<2x10xf32>
    %286 = vector.extract_strided_slice %278 {offsets = [0, 1], sizes = [2, 1], strides = [1, 1]} : vector<2x4xf32> to vector<2x1xf32>
    %c9_127 = arith.constant 9 : index
    %c0_128 = arith.constant 0 : index
    %c0_129 = arith.constant 0 : index
    %287 = vector.load %arg5[%c9_127, %c0_128, %c0_129] : memref<32x1x10xf32, #tpu.memory_space<vmem>>, vector<1x1x10xf32>
    %288 = vector.shape_cast %287 : vector<1x1x10xf32> to vector<1x10xf32>
    %289 = vector.broadcast %286 : vector<2x1xf32> to vector<2x10xf32>
    %290 = vector.broadcast %288 : vector<1x10xf32> to vector<2x10xf32>
    %291 = arith.mulf %289, %290 : vector<2x10xf32>
    %292 = arith.addf %285, %291 : vector<2x10xf32>
    %293 = vector.extract_strided_slice %278 {offsets = [0, 2], sizes = [2, 1], strides = [1, 1]} : vector<2x4xf32> to vector<2x1xf32>
    %c10_130 = arith.constant 10 : index
    %c0_131 = arith.constant 0 : index
    %c0_132 = arith.constant 0 : index
    %294 = vector.load %arg5[%c10_130, %c0_131, %c0_132] : memref<32x1x10xf32, #tpu.memory_space<vmem>>, vector<1x1x10xf32>
    %295 = vector.shape_cast %294 : vector<1x1x10xf32> to vector<1x10xf32>
    %296 = vector.broadcast %293 : vector<2x1xf32> to vector<2x10xf32>
    %297 = vector.broadcast %295 : vector<1x10xf32> to vector<2x10xf32>
    %298 = arith.mulf %296, %297 : vector<2x10xf32>
    %299 = arith.addf %292, %298 : vector<2x10xf32>
    %300 = vector.extract_strided_slice %278 {offsets = [0, 3], sizes = [2, 1], strides = [1, 1]} : vector<2x4xf32> to vector<2x1xf32>
    %c11_133 = arith.constant 11 : index
    %c0_134 = arith.constant 0 : index
    %c0_135 = arith.constant 0 : index
    %301 = vector.load %arg5[%c11_133, %c0_134, %c0_135] : memref<32x1x10xf32, #tpu.memory_space<vmem>>, vector<1x1x10xf32>
    %302 = vector.shape_cast %301 : vector<1x1x10xf32> to vector<1x10xf32>
    %303 = vector.broadcast %300 : vector<2x1xf32> to vector<2x10xf32>
    %304 = vector.broadcast %302 : vector<1x10xf32> to vector<2x10xf32>
    %305 = arith.mulf %303, %304 : vector<2x10xf32>
    %306 = arith.addf %299, %305 : vector<2x10xf32>
    %307 = vector.extract_strided_slice %195 {offsets = [6, 0], sizes = [2, 4], strides = [1, 1]} : vector<8x4xf32> to vector<2x4xf32>
    %308 = vector.extract_strided_slice %307 {offsets = [0, 0], sizes = [2, 1], strides = [1, 1]} : vector<2x4xf32> to vector<2x1xf32>
    %c12_136 = arith.constant 12 : index
    %c0_137 = arith.constant 0 : index
    %c0_138 = arith.constant 0 : index
    %309 = vector.load %arg5[%c12_136, %c0_137, %c0_138] : memref<32x1x10xf32, #tpu.memory_space<vmem>>, vector<1x1x10xf32>
    %310 = vector.shape_cast %309 : vector<1x1x10xf32> to vector<1x10xf32>
    %311 = vector.broadcast %308 : vector<2x1xf32> to vector<2x10xf32>
    %312 = vector.broadcast %310 : vector<1x10xf32> to vector<2x10xf32>
    %313 = arith.mulf %311, %312 : vector<2x10xf32>
    %314 = arith.addf %306, %313 : vector<2x10xf32>
    %315 = vector.extract_strided_slice %307 {offsets = [0, 1], sizes = [2, 1], strides = [1, 1]} : vector<2x4xf32> to vector<2x1xf32>
    %c13_139 = arith.constant 13 : index
    %c0_140 = arith.constant 0 : index
    %c0_141 = arith.constant 0 : index
    %316 = vector.load %arg5[%c13_139, %c0_140, %c0_141] : memref<32x1x10xf32, #tpu.memory_space<vmem>>, vector<1x1x10xf32>
    %317 = vector.shape_cast %316 : vector<1x1x10xf32> to vector<1x10xf32>
    %318 = vector.broadcast %315 : vector<2x1xf32> to vector<2x10xf32>
    %319 = vector.broadcast %317 : vector<1x10xf32> to vector<2x10xf32>
    %320 = arith.mulf %318, %319 : vector<2x10xf32>
    %321 = arith.addf %314, %320 : vector<2x10xf32>
    %322 = vector.extract_strided_slice %307 {offsets = [0, 2], sizes = [2, 1], strides = [1, 1]} : vector<2x4xf32> to vector<2x1xf32>
    %c14_142 = arith.constant 14 : index
    %c0_143 = arith.constant 0 : index
    %c0_144 = arith.constant 0 : index
    %323 = vector.load %arg5[%c14_142, %c0_143, %c0_144] : memref<32x1x10xf32, #tpu.memory_space<vmem>>, vector<1x1x10xf32>
    %324 = vector.shape_cast %323 : vector<1x1x10xf32> to vector<1x10xf32>
    %325 = vector.broadcast %322 : vector<2x1xf32> to vector<2x10xf32>
    %326 = vector.broadcast %324 : vector<1x10xf32> to vector<2x10xf32>
    %327 = arith.mulf %325, %326 : vector<2x10xf32>
    %328 = arith.addf %321, %327 : vector<2x10xf32>
    %329 = vector.extract_strided_slice %307 {offsets = [0, 3], sizes = [2, 1], strides = [1, 1]} : vector<2x4xf32> to vector<2x1xf32>
    %c15_145 = arith.constant 15 : index
    %c0_146 = arith.constant 0 : index
    %c0_147 = arith.constant 0 : index
    %330 = vector.load %arg5[%c15_145, %c0_146, %c0_147] : memref<32x1x10xf32, #tpu.memory_space<vmem>>, vector<1x1x10xf32>
    %331 = vector.shape_cast %330 : vector<1x1x10xf32> to vector<1x10xf32>
    %332 = vector.broadcast %329 : vector<2x1xf32> to vector<2x10xf32>
    %333 = vector.broadcast %331 : vector<1x10xf32> to vector<2x10xf32>
    %334 = arith.mulf %332, %333 : vector<2x10xf32>
    %335 = arith.addf %328, %334 : vector<2x10xf32>
    %336 = vector.extract_strided_slice %215 {offsets = [0, 0], sizes = [2, 4], strides = [1, 1]} : vector<8x4xf32> to vector<2x4xf32>
    %337 = vector.extract_strided_slice %336 {offsets = [0, 0], sizes = [2, 1], strides = [1, 1]} : vector<2x4xf32> to vector<2x1xf32>
    %c16_148 = arith.constant 16 : index
    %c0_149 = arith.constant 0 : index
    %c0_150 = arith.constant 0 : index
    %338 = vector.load %arg5[%c16_148, %c0_149, %c0_150] : memref<32x1x10xf32, #tpu.memory_space<vmem>>, vector<1x1x10xf32>
    %339 = vector.shape_cast %338 : vector<1x1x10xf32> to vector<1x10xf32>
    %340 = vector.broadcast %337 : vector<2x1xf32> to vector<2x10xf32>
    %341 = vector.broadcast %339 : vector<1x10xf32> to vector<2x10xf32>
    %342 = arith.mulf %340, %341 : vector<2x10xf32>
    %343 = arith.addf %335, %342 : vector<2x10xf32>
    %344 = vector.extract_strided_slice %336 {offsets = [0, 1], sizes = [2, 1], strides = [1, 1]} : vector<2x4xf32> to vector<2x1xf32>
    %c17_151 = arith.constant 17 : index
    %c0_152 = arith.constant 0 : index
    %c0_153 = arith.constant 0 : index
    %345 = vector.load %arg5[%c17_151, %c0_152, %c0_153] : memref<32x1x10xf32, #tpu.memory_space<vmem>>, vector<1x1x10xf32>
    %346 = vector.shape_cast %345 : vector<1x1x10xf32> to vector<1x10xf32>
    %347 = vector.broadcast %344 : vector<2x1xf32> to vector<2x10xf32>
    %348 = vector.broadcast %346 : vector<1x10xf32> to vector<2x10xf32>
    %349 = arith.mulf %347, %348 : vector<2x10xf32>
    %350 = arith.addf %343, %349 : vector<2x10xf32>
    %351 = vector.extract_strided_slice %336 {offsets = [0, 2], sizes = [2, 1], strides = [1, 1]} : vector<2x4xf32> to vector<2x1xf32>
    %c18 = arith.constant 18 : index
    %c0_154 = arith.constant 0 : index
    %c0_155 = arith.constant 0 : index
    %352 = vector.load %arg5[%c18, %c0_154, %c0_155] : memref<32x1x10xf32, #tpu.memory_space<vmem>>, vector<1x1x10xf32>
    %353 = vector.shape_cast %352 : vector<1x1x10xf32> to vector<1x10xf32>
    %354 = vector.broadcast %351 : vector<2x1xf32> to vector<2x10xf32>
    %355 = vector.broadcast %353 : vector<1x10xf32> to vector<2x10xf32>
    %356 = arith.mulf %354, %355 : vector<2x10xf32>
    %357 = arith.addf %350, %356 : vector<2x10xf32>
    %358 = vector.extract_strided_slice %336 {offsets = [0, 3], sizes = [2, 1], strides = [1, 1]} : vector<2x4xf32> to vector<2x1xf32>
    %c19 = arith.constant 19 : index
    %c0_156 = arith.constant 0 : index
    %c0_157 = arith.constant 0 : index
    %359 = vector.load %arg5[%c19, %c0_156, %c0_157] : memref<32x1x10xf32, #tpu.memory_space<vmem>>, vector<1x1x10xf32>
    %360 = vector.shape_cast %359 : vector<1x1x10xf32> to vector<1x10xf32>
    %361 = vector.broadcast %358 : vector<2x1xf32> to vector<2x10xf32>
    %362 = vector.broadcast %360 : vector<1x10xf32> to vector<2x10xf32>
    %363 = arith.mulf %361, %362 : vector<2x10xf32>
    %364 = arith.addf %357, %363 : vector<2x10xf32>
    %365 = vector.extract_strided_slice %215 {offsets = [2, 0], sizes = [2, 4], strides = [1, 1]} : vector<8x4xf32> to vector<2x4xf32>
    %366 = vector.extract_strided_slice %365 {offsets = [0, 0], sizes = [2, 1], strides = [1, 1]} : vector<2x4xf32> to vector<2x1xf32>
    %c20 = arith.constant 20 : index
    %c0_158 = arith.constant 0 : index
    %c0_159 = arith.constant 0 : index
    %367 = vector.load %arg5[%c20, %c0_158, %c0_159] : memref<32x1x10xf32, #tpu.memory_space<vmem>>, vector<1x1x10xf32>
    %368 = vector.shape_cast %367 : vector<1x1x10xf32> to vector<1x10xf32>
    %369 = vector.broadcast %366 : vector<2x1xf32> to vector<2x10xf32>
    %370 = vector.broadcast %368 : vector<1x10xf32> to vector<2x10xf32>
    %371 = arith.mulf %369, %370 : vector<2x10xf32>
    %372 = arith.addf %364, %371 : vector<2x10xf32>
    %373 = vector.extract_strided_slice %365 {offsets = [0, 1], sizes = [2, 1], strides = [1, 1]} : vector<2x4xf32> to vector<2x1xf32>
    %c21 = arith.constant 21 : index
    %c0_160 = arith.constant 0 : index
    %c0_161 = arith.constant 0 : index
    %374 = vector.load %arg5[%c21, %c0_160, %c0_161] : memref<32x1x10xf32, #tpu.memory_space<vmem>>, vector<1x1x10xf32>
    %375 = vector.shape_cast %374 : vector<1x1x10xf32> to vector<1x10xf32>
    %376 = vector.broadcast %373 : vector<2x1xf32> to vector<2x10xf32>
    %377 = vector.broadcast %375 : vector<1x10xf32> to vector<2x10xf32>
    %378 = arith.mulf %376, %377 : vector<2x10xf32>
    %379 = arith.addf %372, %378 : vector<2x10xf32>
    %380 = vector.extract_strided_slice %365 {offsets = [0, 2], sizes = [2, 1], strides = [1, 1]} : vector<2x4xf32> to vector<2x1xf32>
    %c22 = arith.constant 22 : index
    %c0_162 = arith.constant 0 : index
    %c0_163 = arith.constant 0 : index
    %381 = vector.load %arg5[%c22, %c0_162, %c0_163] : memref<32x1x10xf32, #tpu.memory_space<vmem>>, vector<1x1x10xf32>
    %382 = vector.shape_cast %381 : vector<1x1x10xf32> to vector<1x10xf32>
    %383 = vector.broadcast %380 : vector<2x1xf32> to vector<2x10xf32>
    %384 = vector.broadcast %382 : vector<1x10xf32> to vector<2x10xf32>
    %385 = arith.mulf %383, %384 : vector<2x10xf32>
    %386 = arith.addf %379, %385 : vector<2x10xf32>
    %387 = vector.extract_strided_slice %365 {offsets = [0, 3], sizes = [2, 1], strides = [1, 1]} : vector<2x4xf32> to vector<2x1xf32>
    %c23 = arith.constant 23 : index
    %c0_164 = arith.constant 0 : index
    %c0_165 = arith.constant 0 : index
    %388 = vector.load %arg5[%c23, %c0_164, %c0_165] : memref<32x1x10xf32, #tpu.memory_space<vmem>>, vector<1x1x10xf32>
    %389 = vector.shape_cast %388 : vector<1x1x10xf32> to vector<1x10xf32>
    %390 = vector.broadcast %387 : vector<2x1xf32> to vector<2x10xf32>
    %391 = vector.broadcast %389 : vector<1x10xf32> to vector<2x10xf32>
    %392 = arith.mulf %390, %391 : vector<2x10xf32>
    %393 = arith.addf %386, %392 : vector<2x10xf32>
    %394 = vector.extract_strided_slice %215 {offsets = [4, 0], sizes = [2, 4], strides = [1, 1]} : vector<8x4xf32> to vector<2x4xf32>
    %395 = vector.extract_strided_slice %394 {offsets = [0, 0], sizes = [2, 1], strides = [1, 1]} : vector<2x4xf32> to vector<2x1xf32>
    %c24 = arith.constant 24 : index
    %c0_166 = arith.constant 0 : index
    %c0_167 = arith.constant 0 : index
    %396 = vector.load %arg5[%c24, %c0_166, %c0_167] : memref<32x1x10xf32, #tpu.memory_space<vmem>>, vector<1x1x10xf32>
    %397 = vector.shape_cast %396 : vector<1x1x10xf32> to vector<1x10xf32>
    %398 = vector.broadcast %395 : vector<2x1xf32> to vector<2x10xf32>
    %399 = vector.broadcast %397 : vector<1x10xf32> to vector<2x10xf32>
    %400 = arith.mulf %398, %399 : vector<2x10xf32>
    %401 = arith.addf %393, %400 : vector<2x10xf32>
    %402 = vector.extract_strided_slice %394 {offsets = [0, 1], sizes = [2, 1], strides = [1, 1]} : vector<2x4xf32> to vector<2x1xf32>
    %c25 = arith.constant 25 : index
    %c0_168 = arith.constant 0 : index
    %c0_169 = arith.constant 0 : index
    %403 = vector.load %arg5[%c25, %c0_168, %c0_169] : memref<32x1x10xf32, #tpu.memory_space<vmem>>, vector<1x1x10xf32>
    %404 = vector.shape_cast %403 : vector<1x1x10xf32> to vector<1x10xf32>
    %405 = vector.broadcast %402 : vector<2x1xf32> to vector<2x10xf32>
    %406 = vector.broadcast %404 : vector<1x10xf32> to vector<2x10xf32>
    %407 = arith.mulf %405, %406 : vector<2x10xf32>
    %408 = arith.addf %401, %407 : vector<2x10xf32>
    %409 = vector.extract_strided_slice %394 {offsets = [0, 2], sizes = [2, 1], strides = [1, 1]} : vector<2x4xf32> to vector<2x1xf32>
    %c26 = arith.constant 26 : index
    %c0_170 = arith.constant 0 : index
    %c0_171 = arith.constant 0 : index
    %410 = vector.load %arg5[%c26, %c0_170, %c0_171] : memref<32x1x10xf32, #tpu.memory_space<vmem>>, vector<1x1x10xf32>
    %411 = vector.shape_cast %410 : vector<1x1x10xf32> to vector<1x10xf32>
    %412 = vector.broadcast %409 : vector<2x1xf32> to vector<2x10xf32>
    %413 = vector.broadcast %411 : vector<1x10xf32> to vector<2x10xf32>
    %414 = arith.mulf %412, %413 : vector<2x10xf32>
    %415 = arith.addf %408, %414 : vector<2x10xf32>
    %416 = vector.extract_strided_slice %394 {offsets = [0, 3], sizes = [2, 1], strides = [1, 1]} : vector<2x4xf32> to vector<2x1xf32>
    %c27 = arith.constant 27 : index
    %c0_172 = arith.constant 0 : index
    %c0_173 = arith.constant 0 : index
    %417 = vector.load %arg5[%c27, %c0_172, %c0_173] : memref<32x1x10xf32, #tpu.memory_space<vmem>>, vector<1x1x10xf32>
    %418 = vector.shape_cast %417 : vector<1x1x10xf32> to vector<1x10xf32>
    %419 = vector.broadcast %416 : vector<2x1xf32> to vector<2x10xf32>
    %420 = vector.broadcast %418 : vector<1x10xf32> to vector<2x10xf32>
    %421 = arith.mulf %419, %420 : vector<2x10xf32>
    %422 = arith.addf %415, %421 : vector<2x10xf32>
    %423 = vector.extract_strided_slice %215 {offsets = [6, 0], sizes = [2, 4], strides = [1, 1]} : vector<8x4xf32> to vector<2x4xf32>
    %424 = vector.extract_strided_slice %423 {offsets = [0, 0], sizes = [2, 1], strides = [1, 1]} : vector<2x4xf32> to vector<2x1xf32>
    %c28 = arith.constant 28 : index
    %c0_174 = arith.constant 0 : index
    %c0_175 = arith.constant 0 : index
    %425 = vector.load %arg5[%c28, %c0_174, %c0_175] : memref<32x1x10xf32, #tpu.memory_space<vmem>>, vector<1x1x10xf32>
    %426 = vector.shape_cast %425 : vector<1x1x10xf32> to vector<1x10xf32>
    %427 = vector.broadcast %424 : vector<2x1xf32> to vector<2x10xf32>
    %428 = vector.broadcast %426 : vector<1x10xf32> to vector<2x10xf32>
    %429 = arith.mulf %427, %428 : vector<2x10xf32>
    %430 = arith.addf %422, %429 : vector<2x10xf32>
    %431 = vector.extract_strided_slice %423 {offsets = [0, 1], sizes = [2, 1], strides = [1, 1]} : vector<2x4xf32> to vector<2x1xf32>
    %c29 = arith.constant 29 : index
    %c0_176 = arith.constant 0 : index
    %c0_177 = arith.constant 0 : index
    %432 = vector.load %arg5[%c29, %c0_176, %c0_177] : memref<32x1x10xf32, #tpu.memory_space<vmem>>, vector<1x1x10xf32>
    %433 = vector.shape_cast %432 : vector<1x1x10xf32> to vector<1x10xf32>
    %434 = vector.broadcast %431 : vector<2x1xf32> to vector<2x10xf32>
    %435 = vector.broadcast %433 : vector<1x10xf32> to vector<2x10xf32>
    %436 = arith.mulf %434, %435 : vector<2x10xf32>
    %437 = arith.addf %430, %436 : vector<2x10xf32>
    %438 = vector.extract_strided_slice %423 {offsets = [0, 2], sizes = [2, 1], strides = [1, 1]} : vector<2x4xf32> to vector<2x1xf32>
    %c30 = arith.constant 30 : index
    %c0_178 = arith.constant 0 : index
    %c0_179 = arith.constant 0 : index
    %439 = vector.load %arg5[%c30, %c0_178, %c0_179] : memref<32x1x10xf32, #tpu.memory_space<vmem>>, vector<1x1x10xf32>
    %440 = vector.shape_cast %439 : vector<1x1x10xf32> to vector<1x10xf32>
    %441 = vector.broadcast %438 : vector<2x1xf32> to vector<2x10xf32>
    %442 = vector.broadcast %440 : vector<1x10xf32> to vector<2x10xf32>
    %443 = arith.mulf %441, %442 : vector<2x10xf32>
    %444 = arith.addf %437, %443 : vector<2x10xf32>
    %445 = vector.extract_strided_slice %423 {offsets = [0, 3], sizes = [2, 1], strides = [1, 1]} : vector<2x4xf32> to vector<2x1xf32>
    %c31 = arith.constant 31 : index
    %c0_180 = arith.constant 0 : index
    %c0_181 = arith.constant 0 : index
    %446 = vector.load %arg5[%c31, %c0_180, %c0_181] : memref<32x1x10xf32, #tpu.memory_space<vmem>>, vector<1x1x10xf32>
    %447 = vector.shape_cast %446 : vector<1x1x10xf32> to vector<1x10xf32>
    %448 = vector.broadcast %445 : vector<2x1xf32> to vector<2x10xf32>
    %449 = vector.broadcast %447 : vector<1x10xf32> to vector<2x10xf32>
    %450 = arith.mulf %448, %449 : vector<2x10xf32>
    %451 = arith.addf %444, %450 : vector<2x10xf32>
    %c0_182 = arith.constant 0 : index
    %c0_183 = arith.constant 0 : index
    %452 = vector.load %arg7[%c0_182, %c0_183] : memref<2x10xf32, #tpu.memory_space<vmem>>, vector<2x10xf32>
    tpu.vector_store %arg7[%c0_182, %c0_183], %451 {strides = array<i32>} : memref<2x10xf32, #tpu.memory_space<vmem>>, vector<2x10xf32>,
    return
  }
}

</mosaic_0001>

<llo_original>
// kernel: convnet_forward.1
$region0: #{convnet_forward.1}
  #allocation0 [shape = 'u32[]', space=smem, size = 0x4, offset = 0x4, fixed_abs, tag = 'smem constant byte address 0x4 - core index']
  #allocation1 [shape = 'u32[144,128]{1,0:T(1,128)}', space=vmem, size = 0x12000, scoped, tag = 'internal scratch']
  %s0 = inlined_call_operand.vmem [shape: f32[9,10,140], index: 0, kind: input, shape index: {}]
  %s1 = inlined_call_operand.vmem [shape: f32[9,1,140], index: 1, kind: input, shape index: {}]
  %s2 = inlined_call_operand.vmem [shape: f32[1,140], index: 2, kind: input, shape index: {}]
  %s3 = inlined_call_operand.vmem [shape: f32[18,1,33], index: 3, kind: input, shape index: {}]
  %s4 = inlined_call_operand.vmem [shape: f32[2], index: 4, kind: input, shape index: {}]
  %s5 = inlined_call_operand.vmem [shape: f32[32,1,10], index: 5, kind: input, shape index: {}]
  %s6 = inlined_call_operand.vmem [shape: f32[1,10], index: 6, kind: input, shape index: {}]
  %s7 = inlined_call_operand.hbm [shape: f32[2,10], index: 7, kind: output, shape index: {}]
  %s8 = sld [smem:[#allocation0]]
  $region42: #{convnet_forward.1} parent=0
    _
  %s10 = ssub.s32 1, %s8
  %s11 = scalar_select 0, %s10, %s8
  $region1: #{convnet_forward.1} parent=0
    #allocation2 [shape = 'u8[512]{0}', space=smem, size = 0x200, scoped, tag = 'input window, operand 4, single buffered']
    #allocation3 [shape = 's32[1]{0}', space=sflag, size = 0x4, scoped, tag = 'scoped memory for convnet_forward.1']
    #allocation4 [shape = 's32[1]{0}', space=sflag, size = 0x4, scoped, tag = 'scoped memory for convnet_forward.1']
    #allocation5 [shape = 'u8[1024]{0}', space=vmem, size = 0x400, scoped, tag = 'output window, operand 0, single buffered']
    %12 = vsyncpa [#allocation4], 0
    %13 = vsyncpa [#allocation3], 0
    // Predicated region
    $region2: #{convnet_forward.1} parent=1 // pred_check
      _
    $region3: #{convnet_forward.1} parent=1 // pred_check_branch
      %15 = sbr.rel (0) target = $region5
    $region4: #{convnet_forward.1} parent=1 // pred_region
      _
    $region5: #{convnet_forward.1} parent=1 // pred_fallthru
      _
    // Predicated region
    $region6: #{convnet_forward.1} parent=1 // pred_check
      _
    $region7: #{convnet_forward.1} parent=1 // pred_check_branch
      %17 = sbr.rel (0) target = $region9
    $region8: #{convnet_forward.1} parent=1 // pred_region
      _
    $region9: #{convnet_forward.1} parent=1 // pred_fallthru
      _
    // Predicated region
    $region10: #{convnet_forward.1} parent=1 // pred_check
      _
    $region11: #{convnet_forward.1} parent=1 // pred_check_branch
      %19 = sbr.rel (0) target = $region13
    $region12: #{convnet_forward.1} parent=1 // pred_region
      _
    $region13: #{convnet_forward.1} parent=1 // pred_fallthru
      _
    // Predicated region
    $region14: #{convnet_forward.1} parent=1 // pred_check
      _
    $region15: #{convnet_forward.1} parent=1 // pred_check_branch
      %21 = sbr.rel (0) target = $region17
    $region16: #{convnet_forward.1} parent=1 // pred_region
      _
    $region17: #{convnet_forward.1} parent=1 // pred_fallthru
      _
    // Predicated region
    $region18: #{convnet_forward.1} parent=1 // pred_check
      _
    $region19: #{convnet_forward.1} parent=1 // pred_check_branch
      %23 = sbr.rel (0) target = $region21
    $region20: #{convnet_forward.1} parent=1 // pred_region
      %s25 = ssub.s32 16, 16
      %26 = vsyncadd [#allocation4], %s25
      %s28 = sshll.u32 %s4, 4
      %s29 = int_to_ptr.vmem [resolvable:$true] %s28
      %31 = dma.vmem_to_smem %s29, 16, [#allocation2], [#allocation4]
    $region21: #{convnet_forward.1} parent=1 // pred_fallthru
      _
    // Predicated region
    $region22: #{convnet_forward.1} parent=1 // pred_check
      _
    $region23: #{convnet_forward.1} parent=1 // pred_check_branch
      %33 = sbr.rel (0) target = $region25
    $region24: #{convnet_forward.1} parent=1 // pred_region
      _
    $region25: #{convnet_forward.1} parent=1 // pred_fallthru
      _
    // Predicated region
    $region26: #{convnet_forward.1} parent=1 // pred_check
      _
    $region27: #{convnet_forward.1} parent=1 // pred_check_branch
      %35 = sbr.rel (0) target = $region29
    $region28: #{convnet_forward.1} parent=1 // pred_region
      _
    $region29: #{convnet_forward.1} parent=1 // pred_fallthru
      _
    // Predicated region
    $region30: #{convnet_forward.1} parent=1 // pred_check
      _
    $region31: #{convnet_forward.1} parent=1 // pred_check_branch
      %37 = sbr.rel (0) target = $region33
    $region32: #{convnet_forward.1} parent=1 // pred_region
      %38 = dma.done [#allocation4], 16
    $region33: #{convnet_forward.1} parent=1 // pred_fallthru
      _
    %39 = sfence
    %v40 = vld [vmem:[%s1] sm:$0x3]
    %v41 = vld [vmem:[%s0] sm:$0xff]
    %v42 = vld [vmem:[%s0 + $0x8] sm:$0xff]
    %v43 = vld [vmem:[%s0 + $0x10] sm:$0x3]
    %v44 = vld [vmem:[%s0 + $0x18] sm:$0x3]
    %v46 = vlaneseq
    %v47 = vshrl.u32 %v46, 7
    %v48 = vsub.s32 0, %v47
    %v49 = vrot.slane %v40, %v48
    %v50 = vlaneseq
    %v51 = vshrl.u32 %v50, 7
    %v52 = vsub.s32 1, %v51
    %v53 = vrot.slane %v40, %v52
    %v56 = vmul.f32 %v49, %v41
    %v57 = vmul.f32 %v53, %v42
    %v58 = vmul.f32 %v49, %v43
    %v59 = vmul.f32 %v53, %v44
    %s60 = scalar_lea.vmem %s1, 2
    %v61 = vld [vmem:[%s60] sm:$0x3]
    %s62 = scalar_lea.vmem %s0, 32
    %v63 = vld [vmem:[%s62] sm:$0xff]
    %v64 = vld [vmem:[%s62 + $0x8] sm:$0xff]
    %v65 = vld [vmem:[%s62 + $0x10] sm:$0x3]
    %v66 = vld [vmem:[%s62 + $0x18] sm:$0x3]
    %v68 = vlaneseq
    %v69 = vshrl.u32 %v68, 7
    %v70 = vsub.s32 0, %v69
    %v71 = vrot.slane %v61, %v70
    %v72 = vlaneseq
    %v73 = vshrl.u32 %v72, 7
    %v74 = vsub.s32 1, %v73
    %v75 = vrot.slane %v61, %v74
    %v78 = vmul.f32 %v71, %v63
    %v79 = vmul.f32 %v75, %v64
    %v80 = vmul.f32 %v71, %v65
    %v81 = vmul.f32 %v75, %v66
    %v82 = vadd.f32 %v56, %v78
    %v83 = vadd.f32 %v57, %v79
    %v84 = vadd.f32 %v58, %v80
    %v85 = vadd.f32 %v59, %v81
    %s86 = scalar_lea.vmem %s1, 4
    %v87 = vld [vmem:[%s86] sm:$0x3]
    %s88 = scalar_lea.vmem %s0, 64
    %v89 = vld [vmem:[%s88] sm:$0xff]
    %v90 = vld [vmem:[%s88 + $0x8] sm:$0xff]
    %v91 = vld [vmem:[%s88 + $0x10] sm:$0x3]
    %v92 = vld [vmem:[%s88 + $0x18] sm:$0x3]
    %v94 = vlaneseq
    %v95 = vshrl.u32 %v94, 7
    %v96 = vsub.s32 0, %v95
    %v97 = vrot.slane %v87, %v96
    %v98 = vlaneseq
    %v99 = vshrl.u32 %v98, 7
    %v100 = vsub.s32 1, %v99
    %v101 = vrot.slane %v87, %v100
    %v104 = vmul.f32 %v97, %v89
    %v105 = vmul.f32 %v101, %v90
    %v106 = vmul.f32 %v97, %v91
    %v107 = vmul.f32 %v101, %v92
    %v108 = vadd.f32 %v82, %v104
    %v109 = vadd.f32 %v83, %v105
    %v110 = vadd.f32 %v84, %v106
    %v111 = vadd.f32 %v85, %v107
    %s112 = scalar_lea.vmem %s1, 6
    %v113 = vld [vmem:[%s112] sm:$0x3]
    %s114 = scalar_lea.vmem %s0, 96
    %v115 = vld [vmem:[%s114] sm:$0xff]
    %v116 = vld [vmem:[%s114 + $0x8] sm:$0xff]
    %v117 = vld [vmem:[%s114 + $0x10] sm:$0x3]
    %v118 = vld [vmem:[%s114 + $0x18] sm:$0x3]
    %v120 = vlaneseq
    %v121 = vshrl.u32 %v120, 7
    %v122 = vsub.s32 0, %v121
    %v123 = vrot.slane %v113, %v122
    %v124 = vlaneseq
    %v125 = vshrl.u32 %v124, 7
    %v126 = vsub.s32 1, %v125
    %v127 = vrot.slane %v113, %v126
    %v130 = vmul.f32 %v123, %v115
    %v131 = vmul.f32 %v127, %v116
    %v132 = vmul.f32 %v123, %v117
    %v133 = vmul.f32 %v127, %v118
    %v134 = vadd.f32 %v108, %v130
    %v135 = vadd.f32 %v109, %v131
    %v136 = vadd.f32 %v110, %v132
    %v137 = vadd.f32 %v111, %v133
    %s138 = scalar_lea.vmem %s1, 8
    %v139 = vld [vmem:[%s138] sm:$0x3]
    %s140 = scalar_lea.vmem %s0, 128
    %v141 = vld [vmem:[%s140] sm:$0xff]
    %v142 = vld [vmem:[%s140 + $0x8] sm:$0xff]
    %v143 = vld [vmem:[%s140 + $0x10] sm:$0x3]
    %v144 = vld [vmem:[%s140 + $0x18] sm:$0x3]
    %v146 = vlaneseq
    %v147 = vshrl.u32 %v146, 7
    %v148 = vsub.s32 0, %v147
    %v149 = vrot.slane %v139, %v148
    %v150 = vlaneseq
    %v151 = vshrl.u32 %v150, 7
    %v152 = vsub.s32 1, %v151
    %v153 = vrot.slane %v139, %v152
    %v156 = vmul.f32 %v149, %v141
    %v157 = vmul.f32 %v153, %v142
    %v158 = vmul.f32 %v149, %v143
    %v159 = vmul.f32 %v153, %v144
    %v160 = vadd.f32 %v134, %v156
    %v161 = vadd.f32 %v135, %v157
    %v162 = vadd.f32 %v136, %v158
    %v163 = vadd.f32 %v137, %v159
    %s164 = scalar_lea.vmem %s1, 10
    %v165 = vld [vmem:[%s164] sm:$0x3]
    %s166 = scalar_lea.vmem %s0, 160
    %v167 = vld [vmem:[%s166] sm:$0xff]
    %v168 = vld [vmem:[%s166 + $0x8] sm:$0xff]
    %v169 = vld [vmem:[%s166 + $0x10] sm:$0x3]
    %v170 = vld [vmem:[%s166 + $0x18] sm:$0x3]
    %v172 = vlaneseq
    %v173 = vshrl.u32 %v172, 7
    %v174 = vsub.s32 0, %v173
    %v175 = vrot.slane %v165, %v174
    %v176 = vlaneseq
    %v177 = vshrl.u32 %v176, 7
    %v178 = vsub.s32 1, %v177
    %v179 = vrot.slane %v165, %v178
    %v182 = vmul.f32 %v175, %v167
    %v183 = vmul.f32 %v179, %v168
    %v184 = vmul.f32 %v175, %v169
    %v185 = vmul.f32 %v179, %v170
    %v186 = vadd.f32 %v160, %v182
    %v187 = vadd.f32 %v161, %v183
    %v188 = vadd.f32 %v162, %v184
    %v189 = vadd.f32 %v163, %v185
    %s190 = scalar_lea.vmem %s1, 12
    %v191 = vld [vmem:[%s190] sm:$0x3]
    %s192 = scalar_lea.vmem %s0, 192
    %v193 = vld [vmem:[%s192] sm:$0xff]
    %v194 = vld [vmem:[%s192 + $0x8] sm:$0xff]
    %v195 = vld [vmem:[%s192 + $0x10] sm:$0x3]
    %v196 = vld [vmem:[%s192 + $0x18] sm:$0x3]
    %v198 = vlaneseq
    %v199 = vshrl.u32 %v198, 7
    %v200 = vsub.s32 0, %v199
    %v201 = vrot.slane %v191, %v200
    %v202 = vlaneseq
    %v203 = vshrl.u32 %v202, 7
    %v204 = vsub.s32 1, %v203
    %v205 = vrot.slane %v191, %v204
    %v208 = vmul.f32 %v201, %v193
    %v209 = vmul.f32 %v205, %v194
    %v210 = vmul.f32 %v201, %v195
    %v211 = vmul.f32 %v205, %v196
    %v212 = vadd.f32 %v186, %v208
    %v213 = vadd.f32 %v187, %v209
    %v214 = vadd.f32 %v188, %v210
    %v215 = vadd.f32 %v189, %v211
    %s216 = scalar_lea.vmem %s1, 14
    %v217 = vld [vmem:[%s216] sm:$0x3]
    %s218 = scalar_lea.vmem %s0, 224
    %v219 = vld [vmem:[%s218] sm:$0xff]
    %v220 = vld [vmem:[%s218 + $0x8] sm:$0xff]
    %v221 = vld [vmem:[%s218 + $0x10] sm:$0x3]
    %v222 = vld [vmem:[%s218 + $0x18] sm:$0x3]
    %v224 = vlaneseq
    %v225 = vshrl.u32 %v224, 7
    %v226 = vsub.s32 0, %v225
    %v227 = vrot.slane %v217, %v226
    %v228 = vlaneseq
    %v229 = vshrl.u32 %v228, 7
    %v230 = vsub.s32 1, %v229
    %v231 = vrot.slane %v217, %v230
    %v234 = vmul.f32 %v227, %v219
    %v235 = vmul.f32 %v231, %v220
    %v236 = vmul.f32 %v227, %v221
    %v237 = vmul.f32 %v231, %v222
    %v238 = vadd.f32 %v212, %v234
    %v239 = vadd.f32 %v213, %v235
    %v240 = vadd.f32 %v214, %v236
    %v241 = vadd.f32 %v215, %v237
    %s242 = scalar_lea.vmem %s1, 16
    %v243 = vld [vmem:[%s242] sm:$0x3]
    %s244 = scalar_lea.vmem %s0, 256
    %v245 = vld [vmem:[%s244] sm:$0xff]
    %v246 = vld [vmem:[%s244 + $0x8] sm:$0xff]
    %v247 = vld [vmem:[%s244 + $0x10] sm:$0x3]
    %v248 = vld [vmem:[%s244 + $0x18] sm:$0x3]
    %v250 = vlaneseq
    %v251 = vshrl.u32 %v250, 7
    %v252 = vsub.s32 0, %v251
    %v253 = vrot.slane %v243, %v252
    %v254 = vlaneseq
    %v255 = vshrl.u32 %v254, 7
    %v256 = vsub.s32 1, %v255
    %v257 = vrot.slane %v243, %v256
    %v260 = vmul.f32 %v253, %v245
    %v261 = vmul.f32 %v257, %v246
    %v262 = vmul.f32 %v253, %v247
    %v263 = vmul.f32 %v257, %v248
    %v264 = vadd.f32 %v238, %v260
    %v265 = vadd.f32 %v239, %v261
    %v266 = vadd.f32 %v240, %v262
    %v267 = vadd.f32 %v241, %v263
    %v268 = vld [vmem:[%s2] sm:$0x3]
    %v270 = vlaneseq
    %v271 = vshrl.u32 %v270, 7
    %v272 = vsub.s32 0, %v271
    %v273 = vrot.slane %v268, %v272
    %v274 = vlaneseq
    %v275 = vshrl.u32 %v274, 7
    %v276 = vsub.s32 1, %v275
    %v277 = vrot.slane %v268, %v276
    %v280 = vadd.f32 %v264, %v273
    %v281 = vadd.f32 %v265, %v277
    %v282 = vadd.f32 %v266, %v273
    %v283 = vadd.f32 %v267, %v277
    %v284 = vmax.f32 %v280, 0.0
    %v285 = vmax.f32 %v281, 0.0
    %v286 = vmax.f32 %v282, 0.0
    %v287 = vmax.f32 %v283, 0.0
    %290 = vrot.lane.b32.xlu0 %v284, 93
    %v291 = vpop.permute.xlu0 %290
    %292 = vrot.lane.b32.xlu0 %v286, 93
    %v293 = vpop.permute.xlu0 %292
    %v296 = vmax.f32 %v284, %v291
    %v297 = vmax.f32 %v286, %v293
    %300 = vrot.lane.b32.xlu0 %v285, 93
    %v301 = vpop.permute.xlu0 %300
    %302 = vrot.lane.b32.xlu0 %v287, 93
    %v303 = vpop.permute.xlu0 %302
    %vm304 = vcmask 760832
    %v305 = vsel %vm304, %v291, %v301
    %v306 = vsel %vm304, %v293, %v303
    %v309 = vmax.f32 %v284, %v305
    %v310 = vmax.f32 %v286, %v306
    %313 = vrot.lane.b32.xlu0 %v309, 58
    %v314 = vpop.permute.xlu0 %313
    %315 = vrot.lane.b32.xlu0 %v310, 58
    %v316 = vpop.permute.xlu0 %315
    %v319 = vmax.f32 %v296, %v314
    %v320 = vmax.f32 %v297, %v316
    %vm323 = vcmask 1041408
    %v324 = vrot.slane %v319, 6
    %v325 = vrot.slane %v320, 6
    %v326 = vsel %vm323, %v324, %v325
    %v329 = vsel %vm323, 0.0, %v324
    %vm330 = vcmask 1043456
    %v331 = vsel %vm330, %v326, 0.0
    %v332 = vld [vmem:[%s3] sm:$0x1]
    %v334 = vlaneseq
    %v335 = vshrl.u32 %v334, 7
    %v336 = vsub.s32 0, %v335
    %v337 = vrot.slane %v332, %v336
    %v339 = vmul.f32 %v337, %v329
    %v340 = vmul.f32 %v337, %v331
    %s341 = scalar_lea.vmem %s3, 1
    %v342 = vld [vmem:[%s341] sm:$0x1]
    %v344 = vlaneseq
    %v345 = vshrl.u32 %v344, 7
    %v346 = vsub.s32 0, %v345
    %v347 = vrot.slane %v342, %v346
    %v349 = vmul.f32 %v347, %v329
    %v350 = vmul.f32 %v347, %v331
    %s351 = scalar_lea.vmem %s3, 2
    %v352 = vld [vmem:[%s351] sm:$0x1]
    %v354 = vlaneseq
    %v355 = vshrl.u32 %v354, 7
    %v356 = vsub.s32 0, %v355
    %v357 = vrot.slane %v352, %v356
    %361 = vrot.lane.b32.xlu0 %v329, 127
    %v362 = vpop.permute.xlu0 %361
    %363 = vrot.lane.b32.xlu0 %v331, 127
    %v364 = vpop.permute.xlu0 %363
    %v367 = vmul.f32 %v357, %v362
    %v368 = vmul.f32 %v357, %v364
    %v369 = vadd.f32 %v339, %v367
    %v370 = vadd.f32 %v340, %v368
    %s371 = scalar_lea.vmem %s3, 3
    %v372 = vld [vmem:[%s371] sm:$0x1]
    %v374 = vlaneseq
    %v375 = vshrl.u32 %v374, 7
    %v376 = vsub.s32 0, %v375
    %v377 = vrot.slane %v372, %v376
    %v379 = vmul.f32 %v377, %v362
    %v380 = vmul.f32 %v377, %v364
    %v381 = vadd.f32 %v349, %v379
    %v382 = vadd.f32 %v350, %v380
    %s383 = scalar_lea.vmem %s3, 4
    %v384 = vld [vmem:[%s383] sm:$0x1]
    %v386 = vlaneseq
    %v387 = vshrl.u32 %v386, 7
    %v388 = vsub.s32 0, %v387
    %v389 = vrot.slane %v384, %v388
    %391 = vrot.lane.b32.xlu0 %v329, 126
    %v392 = vpop.permute.xlu0 %391
    %393 = vrot.lane.b32.xlu0 %v331, 126
    %v394 = vpop.permute.xlu0 %393
    %v397 = vmul.f32 %v389, %v392
    %v398 = vmul.f32 %v389, %v394
    %v399 = vadd.f32 %v369, %v397
    %v400 = vadd.f32 %v370, %v398
    %s401 = scalar_lea.vmem %s3, 5
    %v402 = vld [vmem:[%s401] sm:$0x1]
    %v404 = vlaneseq
    %v405 = vshrl.u32 %v404, 7
    %v406 = vsub.s32 0, %v405
    %v407 = vrot.slane %v402, %v406
    %v409 = vmul.f32 %v407, %v392
    %v410 = vmul.f32 %v407, %v394
    %v411 = vadd.f32 %v381, %v409
    %v412 = vadd.f32 %v382, %v410
    %s413 = scalar_lea.vmem %s3, 6
    %v414 = vld [vmem:[%s413] sm:$0x1]
    %v416 = vlaneseq
    %v417 = vshrl.u32 %v416, 7
    %v418 = vsub.s32 0, %v417
    %v419 = vrot.slane %v414, %v418
    %v421 = vmul.f32 %v419, %v329
    %v422 = vmul.f32 %v419, %v331
    %vm425 = vcmask 1045504
    %v426 = vrot.slane %v421, 2
    %v427 = vrot.slane %v422, 2
    %v428 = vsel %vm425, %v426, %v427
    %v431 = vadd.f32 %v399, %v428
    %v432 = vadd.f32 %v400, %v427
    %s433 = scalar_lea.vmem %s3, 7
    %v434 = vld [vmem:[%s433] sm:$0x1]
    %v436 = vlaneseq
    %v437 = vshrl.u32 %v436, 7
    %v438 = vsub.s32 0, %v437
    %v439 = vrot.slane %v434, %v438
    %v441 = vmul.f32 %v439, %v329
    %v442 = vmul.f32 %v439, %v331
    %v445 = vrot.slane %v441, 2
    %v446 = vrot.slane %v442, 2
    %v447 = vsel %vm425, %v445, %v446
    %v450 = vadd.f32 %v411, %v447
    %v451 = vadd.f32 %v412, %v446
    %s452 = scalar_lea.vmem %s3, 8
    %v453 = vld [vmem:[%s452] sm:$0x1]
    %v455 = vlaneseq
    %v456 = vshrl.u32 %v455, 7
    %v457 = vsub.s32 0, %v456
    %v458 = vrot.slane %v453, %v457
    %v460 = vrot.slane %v329, 2
    %v461 = vrot.slane %v331, 2
    %v462 = vsel %vm425, %v460, %v461
    %463 = vrot.lane.b32.xlu0 %v462, 127
    %v464 = vpop.permute.xlu0 %463
    %465 = vrot.lane.b32.xlu0 %v461, 127
    %v466 = vpop.permute.xlu0 %465
    %v469 = vmul.f32 %v458, %v464
    %v470 = vmul.f32 %v458, %v466
    %v471 = vadd.f32 %v431, %v469
    %v472 = vadd.f32 %v432, %v470
    %s473 = scalar_lea.vmem %s3, 9
    %v474 = vld [vmem:[%s473] sm:$0x1]
    %v476 = vlaneseq
    %v477 = vshrl.u32 %v476, 7
    %v478 = vsub.s32 0, %v477
    %v479 = vrot.slane %v474, %v478
    %v481 = vmul.f32 %v479, %v464
    %v482 = vmul.f32 %v479, %v466
    %v483 = vadd.f32 %v450, %v481
    %v484 = vadd.f32 %v451, %v482
    %s485 = scalar_lea.vmem %s3, 10
    %v486 = vld [vmem:[%s485] sm:$0x1]
    %v488 = vlaneseq
    %v489 = vshrl.u32 %v488, 7
    %v490 = vsub.s32 0, %v489
    %v491 = vrot.slane %v486, %v490
    %493 = vrot.lane.b32.xlu0 %v462, 126
    %v494 = vpop.permute.xlu0 %493
    %495 = vrot.lane.b32.xlu0 %v461, 126
    %v496 = vpop.permute.xlu0 %495
    %v499 = vmul.f32 %v491, %v494
    %v500 = vmul.f32 %v491, %v496
    %v501 = vadd.f32 %v471, %v499
    %v502 = vadd.f32 %v472, %v500
    %s503 = scalar_lea.vmem %s3, 11
    %v504 = vld [vmem:[%s503] sm:$0x1]
    %v506 = vlaneseq
    %v507 = vshrl.u32 %v506, 7
    %v508 = vsub.s32 0, %v507
    %v509 = vrot.slane %v504, %v508
    %v511 = vmul.f32 %v509, %v494
    %v512 = vmul.f32 %v509, %v496
    %v513 = vadd.f32 %v483, %v511
    %v514 = vadd.f32 %v484, %v512
    %s515 = scalar_lea.vmem %s3, 12
    %v516 = vld [vmem:[%s515] sm:$0x1]
    %v518 = vlaneseq
    %v519 = vshrl.u32 %v518, 7
    %v520 = vsub.s32 0, %v519
    %v521 = vrot.slane %v516, %v520
    %v523 = vmul.f32 %v521, %v329
    %v524 = vmul.f32 %v521, %v331
    %v527 = vrot.slane %v523, 4
    %v528 = vrot.slane %v524, 4
    %v529 = vsel %vm330, %v527, %v528
    %v532 = vadd.f32 %v501, %v529
    %v533 = vadd.f32 %v502, %v528
    %s534 = scalar_lea.vmem %s3, 13
    %v535 = vld [vmem:[%s534] sm:$0x1]
    %v537 = vlaneseq
    %v538 = vshrl.u32 %v537, 7
    %v539 = vsub.s32 0, %v538
    %v540 = vrot.slane %v535, %v539
    %v542 = vmul.f32 %v540, %v329
    %v543 = vmul.f32 %v540, %v331
    %v546 = vrot.slane %v542, 4
    %v547 = vrot.slane %v543, 4
    %v548 = vsel %vm330, %v546, %v547
    %v551 = vadd.f32 %v513, %v548
    %v552 = vadd.f32 %v514, %v547
    %s553 = scalar_lea.vmem %s3, 14
    %v554 = vld [vmem:[%s553] sm:$0x1]
    %v556 = vlaneseq
    %v557 = vshrl.u32 %v556, 7
    %v558 = vsub.s32 0, %v557
    %v559 = vrot.slane %v554, %v558
    %v561 = vrot.slane %v329, 4
    %v562 = vrot.slane %v331, 4
    %v563 = vsel %vm330, %v561, %v562
    %564 = vrot.lane.b32.xlu0 %v563, 127
    %v565 = vpop.permute.xlu0 %564
    %566 = vrot.lane.b32.xlu0 %v562, 127
    %v567 = vpop.permute.xlu0 %566
    %v570 = vmul.f32 %v559, %v565
    %v571 = vmul.f32 %v559, %v567
    %v572 = vadd.f32 %v532, %v570
    %v573 = vadd.f32 %v533, %v571
    %s574 = scalar_lea.vmem %s3, 15
    %v575 = vld [vmem:[%s574] sm:$0x1]
    %v577 = vlaneseq
    %v578 = vshrl.u32 %v577, 7
    %v579 = vsub.s32 0, %v578
    %v580 = vrot.slane %v575, %v579
    %v582 = vmul.f32 %v580, %v565
    %v583 = vmul.f32 %v580, %v567
    %v584 = vadd.f32 %v551, %v582
    %v585 = vadd.f32 %v552, %v583
    %s586 = scalar_lea.vmem %s3, 16
    %v587 = vld [vmem:[%s586] sm:$0x1]
    %v589 = vlaneseq
    %v590 = vshrl.u32 %v589, 7
    %v591 = vsub.s32 0, %v590
    %v592 = vrot.slane %v587, %v591
    %594 = vrot.lane.b32.xlu0 %v563, 126
    %v595 = vpop.permute.xlu0 %594
    %596 = vrot.lane.b32.xlu0 %v562, 126
    %v597 = vpop.permute.xlu0 %596
    %v600 = vmul.f32 %v592, %v595
    %v601 = vmul.f32 %v592, %v597
    %v602 = vadd.f32 %v572, %v600
    %v603 = vadd.f32 %v573, %v601
    %s604 = scalar_lea.vmem %s3, 17
    %v605 = vld [vmem:[%s604] sm:$0x1]
    %v607 = vlaneseq
    %v608 = vshrl.u32 %v607, 7
    %v609 = vsub.s32 0, %v608
    %v610 = vrot.slane %v605, %v609
    %v612 = vmul.f32 %v610, %v595
    %v613 = vmul.f32 %v610, %v597
    %v614 = vadd.f32 %v584, %v612
    %v615 = vadd.f32 %v585, %v613
    %618 = vrot.lane.b32.xlu0 %v602, 121
    %v619 = vpop.permute.xlu0 %618
    %620 = vrot.lane.b32.xlu0 %v603, 121
    %v621 = vpop.permute.xlu0 %620
    %v624 = vadd.f32 %v602, %v619
    %v625 = vadd.f32 %v603, %v621
    %626 = vrot.lane.b32.xlu0 %v602, 114
    %v627 = vpop.permute.xlu0 %626
    %628 = vrot.lane.b32.xlu0 %v603, 114
    %v629 = vpop.permute.xlu0 %628
    %v632 = vadd.f32 %v624, %v627
    %v633 = vadd.f32 %v625, %v629
    %634 = vrot.lane.b32.xlu0 %v602, 107
    %v635 = vpop.permute.xlu0 %634
    %636 = vrot.lane.b32.xlu0 %v603, 107
    %v637 = vpop.permute.xlu0 %636
    %v640 = vadd.f32 %v632, %v635
    %v641 = vadd.f32 %v633, %v637
    %642 = vrot.lane.b32.xlu0 %v602, 100
    %v643 = vpop.permute.xlu0 %642
    %644 = vrot.lane.b32.xlu0 %v603, 100
    %v645 = vpop.permute.xlu0 %644
    %v648 = vadd.f32 %v640, %v643
    %v649 = vadd.f32 %v641, %v645
    %s650 = sld [smem:[#allocation2]]
    %v651 = vstv %s650
    %v652 = vadd.f32 %v648, %v651
    %v653 = vadd.f32 %v649, %v651
    %v654 = vmax.f32 %v652, 0.0
    %v655 = vmax.f32 %v653, 0.0
    %658 = vrot.lane.b32.xlu0 %v654, 127
    %v659 = vpop.permute.xlu0 %658
    %660 = vrot.lane.b32.xlu0 %v655, 127
    %v661 = vpop.permute.xlu0 %660
    %v664 = vmax.f32 %v654, %v659
    %v665 = vmax.f32 %v655, %v661
    %v668 = vrot.slane %v664, 2
    %v669 = vrot.slane %v665, 2
    %v670 = vsel %vm425, %v668, %v669
    %v672 = vmax.f32 %v664, %v670
    %675 = vrot.lane.b32.xlu0 %v614, 121
    %v676 = vpop.permute.xlu0 %675
    %677 = vrot.lane.b32.xlu0 %v615, 121
    %v678 = vpop.permute.xlu0 %677
    %v681 = vadd.f32 %v614, %v676
    %v682 = vadd.f32 %v615, %v678
    %683 = vrot.lane.b32.xlu0 %v614, 114
    %v684 = vpop.permute.xlu0 %683
    %685 = vrot.lane.b32.xlu0 %v615, 114
    %v686 = vpop.permute.xlu0 %685
    %v689 = vadd.f32 %v681, %v684
    %v690 = vadd.f32 %v682, %v686
    %691 = vrot.lane.b32.xlu0 %v614, 107
    %v692 = vpop.permute.xlu0 %691
    %693 = vrot.lane.b32.xlu0 %v615, 107
    %v694 = vpop.permute.xlu0 %693
    %v697 = vadd.f32 %v689, %v692
    %v698 = vadd.f32 %v690, %v694
    %699 = vrot.lane.b32.xlu0 %v614, 100
    %v700 = vpop.permute.xlu0 %699
    %701 = vrot.lane.b32.xlu0 %v615, 100
    %v702 = vpop.permute.xlu0 %701
    %v705 = vadd.f32 %v697, %v700
    %v706 = vadd.f32 %v698, %v702
    %s707 = sld [smem:[#allocation2 + $0x1]]
    %v708 = vstv %s707
    %v709 = vadd.f32 %v705, %v708
    %v710 = vadd.f32 %v706, %v708
    %v711 = vmax.f32 %v709, 0.0
    %v712 = vmax.f32 %v710, 0.0
    %715 = vrot.lane.b32.xlu0 %v711, 127
    %v716 = vpop.permute.xlu0 %715
    %717 = vrot.lane.b32.xlu0 %v712, 127
    %v718 = vpop.permute.xlu0 %717
    %v721 = vmax.f32 %v711, %v716
    %v722 = vmax.f32 %v712, %v718
    %v725 = vrot.slane %v721, 2
    %v726 = vrot.slane %v722, 2
    %v727 = vsel %vm425, %v725, %v726
    %v729 = vmax.f32 %v721, %v727
    %v730 = vld [vmem:[%s6] sm:$0x1]
    %v732 = vlaneseq
    %v733 = vshrl.u32 %v732, 7
    %v734 = vsub.s32 0, %v733
    %v735 = vrot.slane %v730, %v734
    %v737 = vadd.f32 %v735, 0.0
    %v738 = vld [vmem:[%s5] sm:$0x1]
    %740 = vset.pattern.permute.xlu0 0
    %741 = vperm.xlu0 %740, %v672
    %v742 = vpop.permute.xlu0 %741
    %v745 = vlaneseq
    %v746 = vshrl.u32 %v745, 7
    %v747 = vsub.s32 0, %v746
    %v748 = vrot.slane %v738, %v747
    %v750 = vmul.f32 %v742, %v748
    %v751 = vadd.f32 %v737, %v750
    %s752 = scalar_lea.vmem %s5, 1
    %v753 = vld [vmem:[%s752] sm:$0x1]
    %754 = vset.pattern.permute.xlu0 1
    %755 = vperm.xlu0 %754, %v672
    %v756 = vpop.permute.xlu0 %755
    %v759 = vlaneseq
    %v760 = vshrl.u32 %v759, 7
    %v761 = vsub.s32 0, %v760
    %v762 = vrot.slane %v753, %v761
    %v764 = vmul.f32 %v756, %v762
    %v765 = vadd.f32 %v751, %v764
    %s766 = scalar_lea.vmem %s5, 2
    %v767 = vld [vmem:[%s766] sm:$0x1]
    %768 = vset.pattern.permute.xlu0 2
    %769 = vperm.xlu0 %768, %v672
    %v770 = vpop.permute.xlu0 %769
    %v773 = vlaneseq
    %v774 = vshrl.u32 %v773, 7
    %v775 = vsub.s32 0, %v774
    %v776 = vrot.slane %v767, %v775
    %v778 = vmul.f32 %v770, %v776
    %v779 = vadd.f32 %v765, %v778
    %s780 = scalar_lea.vmem %s5, 3
    %v781 = vld [vmem:[%s780] sm:$0x1]
    %782 = vset.pattern.permute.xlu0 3
    %783 = vperm.xlu0 %782, %v672
    %v784 = vpop.permute.xlu0 %783
    %v787 = vlaneseq
    %v788 = vshrl.u32 %v787, 7
    %v789 = vsub.s32 0, %v788
    %v790 = vrot.slane %v781, %v789
    %v792 = vmul.f32 %v784, %v790
    %v793 = vadd.f32 %v779, %v792
    %s794 = scalar_lea.vmem %s5, 4
    %v795 = vld [vmem:[%s794] sm:$0x1]
    %v797 = vlaneseq
    %v798 = vshrl.u32 %v797, 7
    %v799 = vsub.s32 0, %v798
    %v800 = vrot.slane %v795, %v799
    %v802 = vmul.f32 %v742, %v800
    %v804 = vrot.slane %v802, 2
    %v806 = vadd.f32 %v793, %v804
    %s807 = scalar_lea.vmem %s5, 5
    %v808 = vld [vmem:[%s807] sm:$0x1]
    %v810 = vlaneseq
    %v811 = vshrl.u32 %v810, 7
    %v812 = vsub.s32 0, %v811
    %v813 = vrot.slane %v808, %v812
    %v815 = vmul.f32 %v756, %v813
    %v817 = vrot.slane %v815, 2
    %v819 = vadd.f32 %v806, %v817
    %s820 = scalar_lea.vmem %s5, 6
    %v821 = vld [vmem:[%s820] sm:$0x1]
    %v823 = vlaneseq
    %v824 = vshrl.u32 %v823, 7
    %v825 = vsub.s32 0, %v824
    %v826 = vrot.slane %v821, %v825
    %v828 = vmul.f32 %v770, %v826
    %v830 = vrot.slane %v828, 2
    %v832 = vadd.f32 %v819, %v830
    %s833 = scalar_lea.vmem %s5, 7
    %v834 = vld [vmem:[%s833] sm:$0x1]
    %v836 = vlaneseq
    %v837 = vshrl.u32 %v836, 7
    %v838 = vsub.s32 0, %v837
    %v839 = vrot.slane %v834, %v838
    %v841 = vmul.f32 %v784, %v839
    %v843 = vrot.slane %v841, 2
    %v845 = vadd.f32 %v832, %v843
    %s846 = scalar_lea.vmem %s5, 8
    %v847 = vld [vmem:[%s846] sm:$0x1]
    %v849 = vlaneseq
    %v850 = vshrl.u32 %v849, 7
    %v851 = vsub.s32 0, %v850
    %v852 = vrot.slane %v847, %v851
    %v854 = vmul.f32 %v742, %v852
    %v856 = vrot.slane %v854, 4
    %v858 = vadd.f32 %v845, %v856
    %s859 = scalar_lea.vmem %s5, 9
    %v860 = vld [vmem:[%s859] sm:$0x1]
    %v862 = vlaneseq
    %v863 = vshrl.u32 %v862, 7
    %v864 = vsub.s32 0, %v863
    %v865 = vrot.slane %v860, %v864
    %v867 = vmul.f32 %v756, %v865
    %v869 = vrot.slane %v867, 4
    %v871 = vadd.f32 %v858, %v869
    %s872 = scalar_lea.vmem %s5, 10
    %v873 = vld [vmem:[%s872] sm:$0x1]
    %v875 = vlaneseq
    %v876 = vshrl.u32 %v875, 7
    %v877 = vsub.s32 0, %v876
    %v878 = vrot.slane %v873, %v877
    %v880 = vmul.f32 %v770, %v878
    %v882 = vrot.slane %v880, 4
    %v884 = vadd.f32 %v871, %v882
    %s885 = scalar_lea.vmem %s5, 11
    %v886 = vld [vmem:[%s885] sm:$0x1]
    %v888 = vlaneseq
    %v889 = vshrl.u32 %v888, 7
    %v890 = vsub.s32 0, %v889
    %v891 = vrot.slane %v886, %v890
    %v893 = vmul.f32 %v784, %v891
    %v895 = vrot.slane %v893, 4
    %v897 = vadd.f32 %v884, %v895
    %s898 = scalar_lea.vmem %s5, 12
    %v899 = vld [vmem:[%s898] sm:$0x1]
    %v901 = vlaneseq
    %v902 = vshrl.u32 %v901, 7
    %v903 = vsub.s32 0, %v902
    %v904 = vrot.slane %v899, %v903
    %v906 = vmul.f32 %v742, %v904
    %v908 = vrot.slane %v906, 6
    %v910 = vadd.f32 %v897, %v908
    %s911 = scalar_lea.vmem %s5, 13
    %v912 = vld [vmem:[%s911] sm:$0x1]
    %v914 = vlaneseq
    %v915 = vshrl.u32 %v914, 7
    %v916 = vsub.s32 0, %v915
    %v917 = vrot.slane %v912, %v916
    %v919 = vmul.f32 %v756, %v917
    %v921 = vrot.slane %v919, 6
    %v923 = vadd.f32 %v910, %v921
    %s924 = scalar_lea.vmem %s5, 14
    %v925 = vld [vmem:[%s924] sm:$0x1]
    %v927 = vlaneseq
    %v928 = vshrl.u32 %v927, 7
    %v929 = vsub.s32 0, %v928
    %v930 = vrot.slane %v925, %v929
    %v932 = vmul.f32 %v770, %v930
    %v934 = vrot.slane %v932, 6
    %v936 = vadd.f32 %v923, %v934
    %s937 = scalar_lea.vmem %s5, 15
    %v938 = vld [vmem:[%s937] sm:$0x1]
    %v940 = vlaneseq
    %v941 = vshrl.u32 %v940, 7
    %v942 = vsub.s32 0, %v941
    %v943 = vrot.slane %v938, %v942
    %v945 = vmul.f32 %v784, %v943
    %v947 = vrot.slane %v945, 6
    %v949 = vadd.f32 %v936, %v947
    %s950 = scalar_lea.vmem %s5, 16
    %v951 = vld [vmem:[%s950] sm:$0x1]
    %953 = vset.pattern.permute.xlu0 0
    %954 = vperm.xlu0 %953, %v729
    %v955 = vpop.permute.xlu0 %954
    %v958 = vlaneseq
    %v959 = vshrl.u32 %v958, 7
    %v960 = vsub.s32 0, %v959
    %v961 = vrot.slane %v951, %v960
    %v963 = vmul.f32 %v955, %v961
    %v964 = vadd.f32 %v949, %v963
    %s965 = scalar_lea.vmem %s5, 17
    %v966 = vld [vmem:[%s965] sm:$0x1]
    %967 = vset.pattern.permute.xlu0 1
    %968 = vperm.xlu0 %967, %v729
    %v969 = vpop.permute.xlu0 %968
    %v972 = vlaneseq
    %v973 = vshrl.u32 %v972, 7
    %v974 = vsub.s32 0, %v973
    %v975 = vrot.slane %v966, %v974
    %v977 = vmul.f32 %v969, %v975
    %v978 = vadd.f32 %v964, %v977
    %s979 = scalar_lea.vmem %s5, 18
    %v980 = vld [vmem:[%s979] sm:$0x1]
    %981 = vset.pattern.permute.xlu0 2
    %982 = vperm.xlu0 %981, %v729
    %v983 = vpop.permute.xlu0 %982
    %v986 = vlaneseq
    %v987 = vshrl.u32 %v986, 7
    %v988 = vsub.s32 0, %v987
    %v989 = vrot.slane %v980, %v988
    %v991 = vmul.f32 %v983, %v989
    %v992 = vadd.f32 %v978, %v991
    %s993 = scalar_lea.vmem %s5, 19
    %v994 = vld [vmem:[%s993] sm:$0x1]
    %995 = vset.pattern.permute.xlu0 3
    %996 = vperm.xlu0 %995, %v729
    %v997 = vpop.permute.xlu0 %996
    %v1000 = vlaneseq
    %v1001 = vshrl.u32 %v1000, 7
    %v1002 = vsub.s32 0, %v1001
    %v1003 = vrot.slane %v994, %v1002
    %v1005 = vmul.f32 %v997, %v1003
    %v1006 = vadd.f32 %v992, %v1005
    %s1007 = scalar_lea.vmem %s5, 20
    %v1008 = vld [vmem:[%s1007] sm:$0x1]
    %v1010 = vlaneseq
    %v1011 = vshrl.u32 %v1010, 7
    %v1012 = vsub.s32 0, %v1011
    %v1013 = vrot.slane %v1008, %v1012
    %v1015 = vmul.f32 %v955, %v1013
    %v1017 = vrot.slane %v1015, 2
    %v1019 = vadd.f32 %v1006, %v1017
    %s1020 = scalar_lea.vmem %s5, 21
    %v1021 = vld [vmem:[%s1020] sm:$0x1]
    %v1023 = vlaneseq
    %v1024 = vshrl.u32 %v1023, 7
    %v1025 = vsub.s32 0, %v1024
    %v1026 = vrot.slane %v1021, %v1025
    %v1028 = vmul.f32 %v969, %v1026
    %v1030 = vrot.slane %v1028, 2
    %v1032 = vadd.f32 %v1019, %v1030
    %s1033 = scalar_lea.vmem %s5, 22
    %v1034 = vld [vmem:[%s1033] sm:$0x1]
    %v1036 = vlaneseq
    %v1037 = vshrl.u32 %v1036, 7
    %v1038 = vsub.s32 0, %v1037
    %v1039 = vrot.slane %v1034, %v1038
    %v1041 = vmul.f32 %v983, %v1039
    %v1043 = vrot.slane %v1041, 2
    %v1045 = vadd.f32 %v1032, %v1043
    %s1046 = scalar_lea.vmem %s5, 23
    %v1047 = vld [vmem:[%s1046] sm:$0x1]
    %v1049 = vlaneseq
    %v1050 = vshrl.u32 %v1049, 7
    %v1051 = vsub.s32 0, %v1050
    %v1052 = vrot.slane %v1047, %v1051
    %v1054 = vmul.f32 %v997, %v1052
    %v1056 = vrot.slane %v1054, 2
    %v1058 = vadd.f32 %v1045, %v1056
    %s1059 = scalar_lea.vmem %s5, 24
    %v1060 = vld [vmem:[%s1059] sm:$0x1]
    %v1062 = vlaneseq
    %v1063 = vshrl.u32 %v1062, 7
    %v1064 = vsub.s32 0, %v1063
    %v1065 = vrot.slane %v1060, %v1064
    %v1067 = vmul.f32 %v955, %v1065
    %v1069 = vrot.slane %v1067, 4
    %v1071 = vadd.f32 %v1058, %v1069
    %s1072 = scalar_lea.vmem %s5, 25
    %v1073 = vld [vmem:[%s1072] sm:$0x1]
    %v1075 = vlaneseq
    %v1076 = vshrl.u32 %v1075, 7
    %v1077 = vsub.s32 0, %v1076
    %v1078 = vrot.slane %v1073, %v1077
    %v1080 = vmul.f32 %v969, %v1078
    %v1082 = vrot.slane %v1080, 4
    %v1084 = vadd.f32 %v1071, %v1082
    %s1085 = scalar_lea.vmem %s5, 26
    %v1086 = vld [vmem:[%s1085] sm:$0x1]
    %v1088 = vlaneseq
    %v1089 = vshrl.u32 %v1088, 7
    %v1090 = vsub.s32 0, %v1089
    %v1091 = vrot.slane %v1086, %v1090
    %v1093 = vmul.f32 %v983, %v1091
    %v1095 = vrot.slane %v1093, 4
    %v1097 = vadd.f32 %v1084, %v1095
    %s1098 = scalar_lea.vmem %s5, 27
    %v1099 = vld [vmem:[%s1098] sm:$0x1]
    %v1101 = vlaneseq
    %v1102 = vshrl.u32 %v1101, 7
    %v1103 = vsub.s32 0, %v1102
    %v1104 = vrot.slane %v1099, %v1103
    %v1106 = vmul.f32 %v997, %v1104
    %v1108 = vrot.slane %v1106, 4
    %v1110 = vadd.f32 %v1097, %v1108
    %s1111 = scalar_lea.vmem %s5, 28
    %v1112 = vld [vmem:[%s1111] sm:$0x1]
    %v1114 = vlaneseq
    %v1115 = vshrl.u32 %v1114, 7
    %v1116 = vsub.s32 0, %v1115
    %v1117 = vrot.slane %v1112, %v1116
    %v1119 = vmul.f32 %v955, %v1117
    %v1121 = vrot.slane %v1119, 6
    %v1123 = vadd.f32 %v1110, %v1121
    %s1124 = scalar_lea.vmem %s5, 29
    %v1125 = vld [vmem:[%s1124] sm:$0x1]
    %v1127 = vlaneseq
    %v1128 = vshrl.u32 %v1127, 7
    %v1129 = vsub.s32 0, %v1128
    %v1130 = vrot.slane %v1125, %v1129
    %v1132 = vmul.f32 %v969, %v1130
    %v1134 = vrot.slane %v1132, 6
    %v1136 = vadd.f32 %v1123, %v1134
    %s1137 = scalar_lea.vmem %s5, 30
    %v1138 = vld [vmem:[%s1137] sm:$0x1]
    %v1140 = vlaneseq
    %v1141 = vshrl.u32 %v1140, 7
    %v1142 = vsub.s32 0, %v1141
    %v1143 = vrot.slane %v1138, %v1142
    %v1145 = vmul.f32 %v983, %v1143
    %v1147 = vrot.slane %v1145, 6
    %v1149 = vadd.f32 %v1136, %v1147
    %s1150 = scalar_lea.vmem %s5, 31
    %v1151 = vld [vmem:[%s1150] sm:$0x1]
    %v1153 = vlaneseq
    %v1154 = vshrl.u32 %v1153, 7
    %v1155 = vsub.s32 0, %v1154
    %v1156 = vrot.slane %v1151, %v1155
    %v1158 = vmul.f32 %v997, %v1156
    %v1160 = vrot.slane %v1158, 6
    %v1162 = vadd.f32 %v1149, %v1160
    %vm1163 = vcmask 74752
    %1164 = vst.msk [vmem:[#allocation5] sm:$0x3] %vm1163, %v1162
    // Predicated region
    $region34: #{convnet_forward.1} parent=1 // pred_check
      _
    $region35: #{convnet_forward.1} parent=1 // pred_check_branch
      %1166 = sbr.rel (0) target = $region37
    $region36: #{convnet_forward.1} parent=1 // pred_region
      %s1168 = ssub.s32 32, 32
      %1169 = vsyncadd [#allocation3], %s1168
      %s1171 = sshll.u32 [#allocation5], 4
      %s1172 = int_to_ptr.vmem [resolvable:$true] %s1171
      %1174 = dma.vmem_to_hbm [thread:$0]  %s1172, 32, %s7, [#allocation3]
    $region37: #{convnet_forward.1} parent=1 // pred_fallthru
      _
    // Predicated region
    $region38: #{convnet_forward.1} parent=1 // pred_check
      _
    $region39: #{convnet_forward.1} parent=1 // pred_check_branch
      %1176 = sbr.rel (0) target = $region41
    $region40: #{convnet_forward.1} parent=1 // pred_region
      %1177 = dma.done [#allocation3], 32
    $region41: #{convnet_forward.1} parent=1 // pred_fallthru
      _
    %1178 = vsyncpa [#allocation3], 1
    %1179 = vsyncpa [#allocation4], 1

</llo_original>
